<compile_context>
chip_gen: v6e
topology: v6e:2x2x1
jax: 0.10.0
libtpu: 0.0.40
codegen_flags: <defaults>
</compile_context>

<pallas_src>
import numpy as np
import jax
import jax.numpy as jnp
from jax.experimental import pallas as pl
from jax.experimental.pallas import tpu as pltpu


# ----------------------------------------------------------------------------
# Pallas kernel: one packed block of Bt sequences per grid step.
#   x_ref:   (Bt, L, C_in)  bf16
#   w1_ref:  (3, C_in, 2S)  bf16     (per-tap conv1 weights)
#   b1_ref:  (1, 2S)        f32
#   w2s_ref: (2S, 3S)       bf16     (conv2 taps stacked along N)
#   b2_ref:  (1, S)         f32
#   o_ref:   (1, Bt, S)     f32
# ----------------------------------------------------------------------------
def style_extractor_kernel(x_ref, w1_ref, b1_ref, w2s_ref, b2_ref, o_ref):
    bt, seq_len, c_in = x_ref.shape
    c2 = b2_ref.shape[1]
    m = bt * seq_len

    x = x_ref[...].reshape(m, c_in)                               # (M, C_in) bf16

    # Row index within the packed M dimension.  Rows at sequence starts / ends
    # are where the conv's zero padding lands; one iota shared by both convs.
    row = jax.lax.broadcasted_iota(jnp.int32, (m, 1), 0)
    is_first = (row % seq_len) == 0
    is_last = (row % seq_len) == (seq_len - 1)

    def shift_prev(t):   # tap k=0 contribution: out[t] += x[t-1] @ W0
        return jnp.where(is_first, 0.0, pltpu.roll(t, shift=1, axis=0))

    def shift_next(t):   # tap k=2 contribution: out[t] += x[t+1] @ W2
        # roll by -1 == roll by M-1 (pltpu.roll requires non-negative shift).
        return jnp.where(is_last, 0.0, pltpu.roll(t, shift=m - 1, axis=0))

    # ---- Conv1 (C_in -> 2S): three tap matmuls (N=2S already fills the MXU).
    t0 = jnp.dot(x, w1_ref[0], preferred_element_type=jnp.float32)
    t1 = jnp.dot(x, w1_ref[1], preferred_element_type=jnp.float32)
    t2 = jnp.dot(x, w1_ref[2], preferred_element_type=jnp.float32)
    h1 = shift_prev(t0) + t1 + shift_next(t2) + b1_ref[...]
    # TODO(synk): PyTorch nn.GELU() defaults to the exact erf form; the tanh
    # approximation is used here (guaranteed Mosaic lowering, |diff| ~ 1e-3).
    h1 = jax.nn.gelu(h1, approximate=True)                        # (M, 2S) f32
    # Dropout(0.1) is identity in eval mode.

    # ---- Conv2 (2S -> S): one matmul against the tap-stacked (2S, 3S) weight,
    # then lane-aligned column slices per tap.
    s = jnp.dot(h1.astype(jnp.bfloat16), w2s_ref[...],
                preferred_element_type=jnp.float32)               # (M, 3S)
    h2 = (shift_prev(s[:, :c2]) + s[:, c2:2 * c2]
          + shift_next(s[:, 2 * c2:]) + b2_ref[...])
    h2 = jax.nn.gelu(h2, approximate=True)                        # (M, S) f32

    # ---- AdaptiveAvgPool1d(1): per-sequence mean over time.
    o_ref[0] = jnp.mean(h2.reshape(bt, seq_len, c2), axis=1)      # (Bt, S)


# ----------------------------------------------------------------------------
# Tiling heuristics.
# ----------------------------------------------------------------------------
def _choose_bt(batch, seq_len):
    """Sequences packed per grid step.

    Targets ~1024 packed rows so the 256-deep MXU M dimension is filled and
    the ~0.35 us per-grid-step overhead is amortized, while keeping the
    per-step VMEM footprint modest on every TPU generation.
    """
    target_rows = 1024
    if seq_len >= target_rows:
        # TODO(synk): very long sequences would additionally want a time-tiled
        # grid axis with a 1-row halo carry and a sum accumulator (important
        # for v7x's 64 MiB VMEM); not implemented here.
        return 1
    per_step = max(1, target_rows // seq_len)
    return min(batch, per_step)


def _vmem_limit(bt, seq_len, c_in, c1, c2):
    m = bt * seq_len
    est = (
        2 * bt * seq_len * c_in * 2                 # double-buffered bf16 x tiles
        + 2 * (3 * c_in * c1 + c1 * 3 * c2) * 2     # bf16 weights (double-buffered)
        + 2 * (c1 + c2) * 4                         # biases
        + 2 * bt * c2 * 4                           # output tiles
        + 8 * m * max(c1, 3 * c2) * 4               # conv temporaries (conservative)
    )
    # Headroom, clamped inside every generation's physical VMEM (v7x: 64 MiB).
    return int(min(max(2 * est, 32 * 1024 * 1024), 64 * 1024 * 1024))


# ----------------------------------------------------------------------------
# Wrapper: layout glue + pallas_call.
# ----------------------------------------------------------------------------
def style_extractor_forward(audio_features, params):
    # audio_features: (B, audio_dim, T) — PyTorch NCL.  Channels-last + bf16:
    # channels sit on the 128-wide lane axis; bf16 halves DMA bytes of the only
    # large streamed operand (f32 accumulation happens on the MXU).
    x = jnp.transpose(audio_features, (0, 2, 1)).astype(jnp.bfloat16)  # (B, T, C_in)
    batch, seq_len, c_in = x.shape

    w1 = params["conv1_w"].astype(jnp.bfloat16)    # (3, C_in, 2S)
    b1 = params["conv1_b"].astype(jnp.float32)     # (1, 2S)
    w2 = params["conv2_w"].astype(jnp.bfloat16)    # (3, 2S, S)
    b2 = params["conv2_b"].astype(jnp.float32)     # (1, S)
    c1 = w1.shape[2]
    c2 = w2.shape[2]
    # Stack conv2 taps along N -> (2S, 3S): one full-width MXU matmul.
    w2s = jnp.concatenate([w2[0], w2[1], w2[2]], axis=1)

    bt = _choose_bt(batch, seq_len)
    nb = -(-batch // bt)
    b_pad = nb * bt
    if b_pad != batch:
        x = jnp.concatenate(
            [x, jnp.zeros((b_pad - batch, seq_len, c_in), x.dtype)], axis=0)

    grid_spec = pltpu.PrefetchScalarGridSpec(
        num_scalar_prefetch=0,
        grid=(nb,),
        in_specs=[
            pl.BlockSpec((bt, seq_len, c_in), lambda b: (b, 0, 0)),  # x block
            pl.BlockSpec((3, c_in, c1), lambda b: (0, 0, 0)),        # conv1 W (resident)
            pl.BlockSpec((1, c1), lambda b: (0, 0)),                 # conv1 b
            pl.BlockSpec((c1, 3 * c2), lambda b: (0, 0)),            # conv2 W stacked
            pl.BlockSpec((1, c2), lambda b: (0, 0)),                 # conv2 b
        ],
        # 3-D output: block's trailing dims equal the full array dims, so any
        # Bt is a legal (lane-dense) output tile.
        out_specs=pl.BlockSpec((1, bt, c2), lambda b: (b, 0, 0)),
    )

    out = pl.pallas_call(
        style_extractor_kernel,
        out_shape=jax.ShapeDtypeStruct((nb, bt, c2), jnp.float32),
        grid_spec=grid_spec,
        compiler_params=pltpu.CompilerParams(
            dimension_semantics=("parallel",),
            vmem_limit_bytes=_vmem_limit(bt, seq_len, c_in, c1, c2),
        ),
    )(x, w1, b1, w2s, b2)

    return out.reshape(b_pad, c2)[:batch]


# ----------------------------------------------------------------------------
# Deterministic synthetic parameters (shapes from the module __init__).
# Conv weights are stored taps-first, channels-last-matmul layout:
#   conv_w[k] == torch_weight[:, :, k].T  (C_in, C_out)
# ----------------------------------------------------------------------------
def init_params(key, audio_dim=512, style_dim=128):
    c1 = style_dim * 2
    ks = jax.random.split(key, 4)

    def n(k, shape, scale=0.02):
        return jax.random.normal(k, shape, jnp.float32) * scale

    return {
        "conv1_w": n(ks[0], (3, audio_dim, c1)),
        "conv1_b": n(ks[1], (1, c1)),
        "conv2_w": n(ks[2], (3, c1, style_dim)),
        "conv2_b": n(ks[3], (1, style_dim)),
    }


# ----------------------------------------------------------------------------
# Pure-JAX f32 reference (identical math, f32 weights) for correctness check.
# ----------------------------------------------------------------------------
def style_extractor_reference(audio_features, params):
    x = jnp.transpose(audio_features, (0, 2, 1)).astype(jnp.float32)  # (B, T, C)

    def conv3_gelu(z, w, b):
        zero = jnp.zeros_like(z[:, :1])
        z_prev = jnp.concatenate([zero, z[:, :-1]], axis=1)
        z_next = jnp.concatenate([z[:, 1:], zero], axis=1)
        y = z_prev @ w[0] + z @ w[1] + z_next @ w[2] + b
        return jax.nn.gelu(y, approximate=True)

    h1 = conv3_gelu(x, params["conv1_w"], params["conv1_b"])
    h2 = conv3_gelu(h1, params["conv2_w"], params["conv2_b"])
    return h2.mean(axis=1)


if __name__ == "__main__":
    audio_dim, style_dim = 512, 128   # module defaults
    B, T = 2, 16                      # small test shapes

    key = jax.random.PRNGKey(0)
    pkey, xkey = jax.random.split(key)
    params = init_params(pkey, audio_dim, style_dim)
    audio = jax.random.normal(xkey, (B, audio_dim, T), jnp.float32)

    out = style_extractor_forward(audio, params)
    out = jax.block_until_ready(out)
    assert out.shape == (B, style_dim)

    ref = style_extractor_reference(audio, params)
    np.testing.assert_allclose(np.asarray(out), np.asarray(ref),
                               atol=2e-2, rtol=2e-2)
    print("KERNEL_OK")
</pallas_src>

<mosaic_0001>
module attributes {stable_mosaic.version = 11 : i64} {
  func.func @style_extractor_kernel(%arg0: i32, %arg1: memref<2x16x512xbf16, #tpu.memory_space<vmem>>, %arg2: memref<3x512x256xbf16, #tpu.memory_space<vmem>>, %arg3: memref<1x256xf32, #tpu.memory_space<vmem>>, %arg4: memref<256x384xbf16, #tpu.memory_space<vmem>>, %arg5: memref<1x128xf32, #tpu.memory_space<vmem>>, %arg6: memref<1x2x128xf32, #tpu.memory_space<vmem>>) attributes {dimension_semantics = [#tpu.dimension_semantics<parallel>], iteration_bounds = array<i64: 1>, scalar_prefetch = 0 : i64, scratch_operands = 0 : i64, tpu.core_type = #tpu.core_type<tc>, window_params = [{transform_indices = @transform_0, window_bounds = array<i64: 2, 16, 512>}, {pipeline_mode = #tpu.pipeline_mode<synchronous>, transform_indices = @transform_1, window_bounds = array<i64: 3, 512, 256>}, {pipeline_mode = #tpu.pipeline_mode<synchronous>, transform_indices = @transform_2, window_bounds = array<i64: 1, 256>}, {pipeline_mode = #tpu.pipeline_mode<synchronous>, transform_indices = @transform_3, window_bounds = array<i64: 256, 384>}, {pipeline_mode = #tpu.pipeline_mode<synchronous>, transform_indices = @transform_4, window_bounds = array<i64: 1, 128>}, {transform_indices = @transform_5, window_bounds = array<i64: 1, 2, 128>}]} {
    %c0 = arith.constant 0 : index
    %c0_0 = arith.constant 0 : index
    %c0_1 = arith.constant 0 : index
    %0 = vector.load %arg1[%c0, %c0_0, %c0_1] : memref<2x16x512xbf16, #tpu.memory_space<vmem>>, vector<2x16x512xbf16>
    %1 = vector.shape_cast %0 : vector<2x16x512xbf16> to vector<32x512xbf16>
    %2 = tpu.iota {dimensions = array<i32: 0>} : vector<32x1xi32>
    %c16_i32 = arith.constant 16 : i32
    %c0_i32 = arith.constant 0 : i32
    %3 = arith.cmpi eq, %c16_i32, %c0_i32 : i32
    %c1_i32 = arith.constant 1 : i32
    %4 = arith.select %3, %c1_i32, %c16_i32 : i32
    %5 = vector.broadcast %4 : i32 to vector<32x1xi32>
    %6 = arith.remsi %2, %5 : vector<32x1xi32>
    %c0_i32_2 = arith.constant 0 : i32
    %7 = vector.broadcast %c0_i32_2 : i32 to vector<32x1xi32>
    %8 = arith.cmpi ne, %6, %7 : vector<32x1xi32>
    %c0_i32_3 = arith.constant 0 : i32
    %9 = vector.broadcast %c0_i32_3 : i32 to vector<32x1xi32>
    %10 = arith.cmpi slt, %6, %9 : vector<32x1xi32>
    %c0_i32_4 = arith.constant 0 : i32
    %11 = arith.cmpi slt, %4, %c0_i32_4 : i32
    %12 = vector.broadcast %11 : i1 to vector<32x1xi1>
    %13 = vector.broadcast %12 : vector<32x1xi1> to vector<32x1xi1>
    %14 = arith.xori %10, %13 : vector<32x1xi1>
    %15 = arith.andi %14, %8 : vector<32x1xi1>
    %16 = vector.broadcast %4 : i32 to vector<32x1xi32>
    %17 = arith.addi %6, %16 : vector<32x1xi32>
    %18 = arith.select %15, %17, %6 : vector<32x1xi1>, vector<32x1xi32>
    %c0_i32_5 = arith.constant 0 : i32
    %19 = vector.broadcast %c0_i32_5 : i32 to vector<32x1xi32>
    %20 = arith.cmpi eq, %18, %19 : vector<32x1xi32>
    %c16_i32_6 = arith.constant 16 : i32
    %c0_i32_7 = arith.constant 0 : i32
    %21 = arith.cmpi eq, %c16_i32_6, %c0_i32_7 : i32
    %c1_i32_8 = arith.constant 1 : i32
    %22 = arith.select %21, %c1_i32_8, %c16_i32_6 : i32
    %23 = vector.broadcast %22 : i32 to vector<32x1xi32>
    %24 = arith.remsi %2, %23 : vector<32x1xi32>
    %c0_i32_9 = arith.constant 0 : i32
    %25 = vector.broadcast %c0_i32_9 : i32 to vector<32x1xi32>
    %26 = arith.cmpi ne, %24, %25 : vector<32x1xi32>
    %c0_i32_10 = arith.constant 0 : i32
    %27 = vector.broadcast %c0_i32_10 : i32 to vector<32x1xi32>
    %28 = arith.cmpi slt, %24, %27 : vector<32x1xi32>
    %c0_i32_11 = arith.constant 0 : i32
    %29 = arith.cmpi slt, %22, %c0_i32_11 : i32
    %30 = vector.broadcast %29 : i1 to vector<32x1xi1>
    %31 = vector.broadcast %30 : vector<32x1xi1> to vector<32x1xi1>
    %32 = arith.xori %28, %31 : vector<32x1xi1>
    %33 = arith.andi %32, %26 : vector<32x1xi1>
    %34 = vector.broadcast %22 : i32 to vector<32x1xi32>
    %35 = arith.addi %24, %34 : vector<32x1xi32>
    %36 = arith.select %33, %35, %24 : vector<32x1xi1>, vector<32x1xi32>
    %c15_i32 = arith.constant 15 : i32
    %37 = vector.broadcast %c15_i32 : i32 to vector<32x1xi32>
    %38 = arith.cmpi eq, %36, %37 : vector<32x1xi32>
    %c0_12 = arith.constant 0 : index
    %c0_13 = arith.constant 0 : index
    %c0_14 = arith.constant 0 : index
    %39 = vector.load %arg2[%c0_12, %c0_13, %c0_14] : memref<3x512x256xbf16, #tpu.memory_space<vmem>>, vector<1x512x256xbf16>
    %40 = vector.shape_cast %39 : vector<1x512x256xbf16> to vector<512x256xbf16>
    %cst = arith.constant dense<0.000000e+00> : vector<32x256xf32>
    %41 = tpu.matmul %1, %40, %cst {dimension_numbers = #tpu.dot_dimension_numbers<[1], [0], [0], [1], [0, 0, 1, 1], [], []>} : vector<32x512xbf16>, vector<512x256xbf16>, vector<32x256xf32> -> vector<32x256xf32>
    %c1 = arith.constant 1 : index
    %c0_15 = arith.constant 0 : index
    %c0_16 = arith.constant 0 : index
    %42 = vector.load %arg2[%c1, %c0_15, %c0_16] : memref<3x512x256xbf16, #tpu.memory_space<vmem>>, vector<1x512x256xbf16>
    %43 = vector.shape_cast %42 : vector<1x512x256xbf16> to vector<512x256xbf16>
    %cst_17 = arith.constant dense<0.000000e+00> : vector<32x256xf32>
    %44 = tpu.matmul %1, %43, %cst_17 {dimension_numbers = #tpu.dot_dimension_numbers<[1], [0], [0], [1], [0, 0, 1, 1], [], []>} : vector<32x512xbf16>, vector<512x256xbf16>, vector<32x256xf32> -> vector<32x256xf32>
    %c2 = arith.constant 2 : index
    %c0_18 = arith.constant 0 : index
    %c0_19 = arith.constant 0 : index
    %45 = vector.load %arg2[%c2, %c0_18, %c0_19] : memref<3x512x256xbf16, #tpu.memory_space<vmem>>, vector<1x512x256xbf16>
    %46 = vector.shape_cast %45 : vector<1x512x256xbf16> to vector<512x256xbf16>
    %cst_20 = arith.constant dense<0.000000e+00> : vector<32x256xf32>
    %47 = tpu.matmul %1, %46, %cst_20 {dimension_numbers = #tpu.dot_dimension_numbers<[1], [0], [0], [1], [0, 0, 1, 1], [], []>} : vector<32x512xbf16>, vector<512x256xbf16>, vector<32x256xf32> -> vector<32x256xf32>
    %c1_i32_21 = arith.constant 1 : i32
    %48 = tpu.dynamic_rotate %41 by %c1_i32_21 dim 0 : vector<32x256xf32>, i32 -> vector<32x256xf32>
    %cst_22 = arith.constant 0.000000e+00 : f32
    %49 = vector.shape_cast %20 : vector<32x1xi1> to vector<32x1xi1>
    %50 = vector.broadcast %49 : vector<32x1xi1> to vector<32x256xi1>
    %51 = vector.broadcast %cst_22 : f32 to vector<32x256xf32>
    %52 = arith.select %50, %51, %48 : vector<32x256xi1>, vector<32x256xf32>
    %53 = arith.addf %52, %44 : vector<32x256xf32>
    %c31_i32 = arith.constant 31 : i32
    %54 = tpu.dynamic_rotate %47 by %c31_i32 dim 0 : vector<32x256xf32>, i32 -> vector<32x256xf32>
    %cst_23 = arith.constant 0.000000e+00 : f32
    %55 = vector.shape_cast %38 : vector<32x1xi1> to vector<32x1xi1>
    %56 = vector.broadcast %55 : vector<32x1xi1> to vector<32x256xi1>
    %57 = vector.broadcast %cst_23 : f32 to vector<32x256xf32>
    %58 = arith.select %56, %57, %54 : vector<32x256xi1>, vector<32x256xf32>
    %59 = arith.addf %53, %58 : vector<32x256xf32>
    %c0_24 = arith.constant 0 : index
    %c0_25 = arith.constant 0 : index
    %60 = vector.load %arg3[%c0_24, %c0_25] : memref<1x256xf32, #tpu.memory_space<vmem>>, vector<1x256xf32>
    %61 = vector.broadcast %60 : vector<1x256xf32> to vector<32x256xf32>
    %62 = arith.addf %59, %61 : vector<32x256xf32>
    %63 = arith.mulf %62, %62 : vector<32x256xf32>
    %64 = arith.mulf %62, %63 : vector<32x256xf32>
    %cst_26 = arith.constant 4.471500e-02 : f32
    %65 = vector.broadcast %cst_26 : f32 to vector<32x256xf32>
    %66 = arith.mulf %65, %64 : vector<32x256xf32>
    %67 = arith.addf %62, %66 : vector<32x256xf32>
    %cst_27 = arith.constant 0.797884583 : f32
    %68 = vector.broadcast %cst_27 : f32 to vector<32x256xf32>
    %69 = arith.mulf %68, %67 : vector<32x256xf32>
    %70 = math.tanh %69 : vector<32x256xf32>
    %cst_28 = arith.constant 1.000000e+00 : f32
    %71 = vector.broadcast %cst_28 : f32 to vector<32x256xf32>
    %72 = arith.addf %71, %70 : vector<32x256xf32>
    %cst_29 = arith.constant 5.000000e-01 : f32
    %73 = vector.broadcast %cst_29 : f32 to vector<32x256xf32>
    %74 = arith.mulf %73, %72 : vector<32x256xf32>
    %75 = arith.mulf %62, %74 : vector<32x256xf32>
    %76 = arith.truncf %75 : vector<32x256xf32> to vector<32x256xbf16>
    %c0_30 = arith.constant 0 : index
    %c0_31 = arith.constant 0 : index
    %77 = vector.load %arg4[%c0_30, %c0_31] : memref<256x384xbf16, #tpu.memory_space<vmem>>, vector<256x384xbf16>
    %cst_32 = arith.constant dense<0.000000e+00> : vector<32x384xf32>
    %78 = tpu.matmul %76, %77, %cst_32 {dimension_numbers = #tpu.dot_dimension_numbers<[1], [0], [0], [1], [0, 0, 1, 1], [], []>} : vector<32x256xbf16>, vector<256x384xbf16>, vector<32x384xf32> -> vector<32x384xf32>
    %79 = vector.extract_strided_slice %78 {offsets = [0, 0], sizes = [32, 128], strides = [1, 1]} : vector<32x384xf32> to vector<32x128xf32>
    %c1_i32_33 = arith.constant 1 : i32
    %80 = tpu.dynamic_rotate %79 by %c1_i32_33 dim 0 : vector<32x128xf32>, i32 -> vector<32x128xf32>
    %cst_34 = arith.constant 0.000000e+00 : f32
    %81 = vector.shape_cast %20 : vector<32x1xi1> to vector<32x1xi1>
    %82 = vector.broadcast %81 : vector<32x1xi1> to vector<32x128xi1>
    %83 = vector.broadcast %cst_34 : f32 to vector<32x128xf32>
    %84 = arith.select %82, %83, %80 : vector<32x128xi1>, vector<32x128xf32>
    %85 = vector.extract_strided_slice %78 {offsets = [0, 128], sizes = [32, 128], strides = [1, 1]} : vector<32x384xf32> to vector<32x128xf32>
    %86 = arith.addf %84, %85 : vector<32x128xf32>
    %87 = vector.extract_strided_slice %78 {offsets = [0, 256], sizes = [32, 128], strides = [1, 1]} : vector<32x384xf32> to vector<32x128xf32>
    %c31_i32_35 = arith.constant 31 : i32
    %88 = tpu.dynamic_rotate %87 by %c31_i32_35 dim 0 : vector<32x128xf32>, i32 -> vector<32x128xf32>
    %cst_36 = arith.constant 0.000000e+00 : f32
    %89 = vector.shape_cast %38 : vector<32x1xi1> to vector<32x1xi1>
    %90 = vector.broadcast %89 : vector<32x1xi1> to vector<32x128xi1>
    %91 = vector.broadcast %cst_36 : f32 to vector<32x128xf32>
    %92 = arith.select %90, %91, %88 : vector<32x128xi1>, vector<32x128xf32>
    %93 = arith.addf %86, %92 : vector<32x128xf32>
    %c0_37 = arith.constant 0 : index
    %c0_38 = arith.constant 0 : index
    %94 = vector.load %arg5[%c0_37, %c0_38] : memref<1x128xf32, #tpu.memory_space<vmem>>, vector<1x128xf32>
    %95 = vector.broadcast %94 : vector<1x128xf32> to vector<32x128xf32>
    %96 = arith.addf %93, %95 : vector<32x128xf32>
    %97 = arith.mulf %96, %96 : vector<32x128xf32>
    %98 = arith.mulf %96, %97 : vector<32x128xf32>
    %cst_39 = arith.constant 4.471500e-02 : f32
    %99 = vector.broadcast %cst_39 : f32 to vector<32x128xf32>
    %100 = arith.mulf %99, %98 : vector<32x128xf32>
    %101 = arith.addf %96, %100 : vector<32x128xf32>
    %cst_40 = arith.constant 0.797884583 : f32
    %102 = vector.broadcast %cst_40 : f32 to vector<32x128xf32>
    %103 = arith.mulf %102, %101 : vector<32x128xf32>
    %104 = math.tanh %103 : vector<32x128xf32>
    %cst_41 = arith.constant 1.000000e+00 : f32
    %105 = vector.broadcast %cst_41 : f32 to vector<32x128xf32>
    %106 = arith.addf %105, %104 : vector<32x128xf32>
    %cst_42 = arith.constant 5.000000e-01 : f32
    %107 = vector.broadcast %cst_42 : f32 to vector<32x128xf32>
    %108 = arith.mulf %107, %106 : vector<32x128xf32>
    %109 = arith.mulf %96, %108 : vector<32x128xf32>
    %110 = vector.shape_cast %109 : vector<32x128xf32> to vector<2x16x128xf32>
    %cst_43 = arith.constant dense<0.000000e+00> : vector<2x128xf32>
    %111 = vector.multi_reduction <add>, %110, %cst_43 [1] : vector<2x16x128xf32> to vector<2x128xf32>
    %cst_44 = arith.constant 1.600000e+01 : f32
    %112 = vector.broadcast %cst_44 : f32 to vector<2x128xf32>
    %113 = arith.divf %111, %112 : vector<2x128xf32>
    %c0_45 = arith.constant 0 : index
    %c0_46 = arith.constant 0 : index
    %c0_47 = arith.constant 0 : index
    %114 = vector.load %arg6[%c0_45, %c0_46, %c0_47] : memref<1x2x128xf32, #tpu.memory_space<vmem>>, vector<1x2x128xf32>
    %115 = vector.shape_cast %114 : vector<1x2x128xf32> to vector<2x128xf32>
    %116 = vector.shape_cast %113 : vector<2x128xf32> to vector<1x2x128xf32>
    tpu.vector_store %arg6[%c0_45, %c0_46, %c0_47], %116 {strides = array<i32>} : memref<1x2x128xf32, #tpu.memory_space<vmem>>, vector<1x2x128xf32>,
    return
  }
  func.func @transform_0(%arg0: i32) -> (i32, i32, i32) {
    %c0_i32 = arith.constant 0 : i32
    %c0_i32_0 = arith.constant 0 : i32
    %c0_i32_1 = arith.constant 0 : i32
    return %arg0, %c0_i32, %c0_i32_0 : i32, i32, i32
  }
  func.func @transform_1(%arg0: i32) -> (i32, i32, i32) {
    %c0_i32 = arith.constant 0 : i32
    %c0_i32_0 = arith.constant 0 : i32
    %c0_i32_1 = arith.constant 0 : i32
    %c0_i32_2 = arith.constant 0 : i32
    return %c0_i32, %c0_i32_0, %c0_i32_1 : i32, i32, i32
  }
  func.func @transform_2(%arg0: i32) -> (i32, i32) {
    %c0_i32 = arith.constant 0 : i32
    %c0_i32_0 = arith.constant 0 : i32
    %c0_i32_1 = arith.constant 0 : i32
    return %c0_i32, %c0_i32_0 : i32, i32
  }
  func.func @transform_3(%arg0: i32) -> (i32, i32) {
    %c0_i32 = arith.constant 0 : i32
    %c0_i32_0 = arith.constant 0 : i32
    %c0_i32_1 = arith.constant 0 : i32
    return %c0_i32, %c0_i32_0 : i32, i32
  }
  func.func @transform_4(%arg0: i32) -> (i32, i32) {
    %c0_i32 = arith.constant 0 : i32
    %c0_i32_0 = arith.constant 0 : i32
    %c0_i32_1 = arith.constant 0 : i32
    return %c0_i32, %c0_i32_0 : i32, i32
  }
  func.func @transform_5(%arg0: i32) -> (i32, i32, i32) {
    %c0_i32 = arith.constant 0 : i32
    %c0_i32_0 = arith.constant 0 : i32
    %c0_i32_1 = arith.constant 0 : i32
    return %arg0, %c0_i32, %c0_i32_0 : i32, i32, i32
  }
}

</mosaic_0001>

<llo_original>
// kernel: tpu_custom_call.1
$region0: #{tpu_custom_call.1}
  #allocation0 [shape = 'u32[]', space=smem, size = 0x4, offset = 0x4, fixed_abs, tag = 'smem constant byte address 0x4 - core index']
  #allocation1 [shape = 'u32[144,128]{1,0:T(1,128)}', space=vmem, size = 0x12000, scoped, tag = 'internal scratch']
  %s0 = inlined_call_operand.hbm [shape: bf16[2,16,512], index: 0, kind: input, shape index: {}]
  %s1 = inlined_call_operand.hbm [shape: bf16[3,512,256], index: 1, kind: input, shape index: {}]
  %s2 = inlined_call_operand.vmem [shape: f32[1,256], index: 2, kind: input, shape index: {}]
  %s3 = inlined_call_operand.hbm [shape: bf16[256,384], index: 3, kind: input, shape index: {}]
  %s4 = inlined_call_operand.vmem [shape: f32[1,128], index: 4, kind: input, shape index: {}]
  %s5 = inlined_call_operand.hbm [shape: f32[1,2,128], index: 5, kind: output, shape index: {}]
  %s6 = sld [smem:[#allocation0]]
  $region42: #{tpu_custom_call.1} parent=0
    _
  %s8 = ssub.s32 1, %s6
  %s9 = scalar_select 0, %s8, %s6
  $region1: #{tpu_custom_call.1} parent=0
    #allocation2 [shape = 'u8[32768]{0}', space=vmem, size = 0x8000, scoped, tag = 'input window, operand 0, single buffered']
    #allocation3 [shape = 's32[1]{0}', space=sflag, size = 0x4, scoped, tag = 'scoped memory for tpu_custom_call.1']
    #allocation4 [shape = 's32[1]{0}', space=sflag, size = 0x4, scoped, tag = 'scoped memory for tpu_custom_call.1']
    #allocation5 [shape = 'u8[786432]{0}', space=vmem, size = 0xc0000, scoped, tag = 'input window, operand 1, single buffered']
    #allocation6 [shape = 's32[1]{0}', space=sflag, size = 0x4, scoped, tag = 'scoped memory for tpu_custom_call.1']
    #allocation7 [shape = 'u8[196608]{0}', space=vmem, size = 0x30000, scoped, tag = 'input window, operand 3, single buffered']
    #allocation8 [shape = 'u8[1024]{0}', space=vmem, size = 0x400, scoped, tag = 'output window, operand 0, single buffered']
    %10 = vsyncpa [#allocation3], 0
    %11 = vsyncpa [#allocation6], 0
    %12 = vsyncpa [#allocation4], 0
    // Predicated region
    $region2: #{tpu_custom_call.1} parent=1 // pred_check
      _
    $region3: #{tpu_custom_call.1} parent=1 // pred_check_branch
      %14 = sbr.rel (0) target = $region5
    $region4: #{tpu_custom_call.1} parent=1 // pred_region
      %s16 = ssub.s32 1024, 1024
      %17 = vsyncadd [#allocation3], %s16
      %s18 = sshll.u32 [#allocation2], 4
      %s19 = int_to_ptr.vmem [resolvable:$true] %s18
      %24 = dma.hbm_to_vmem [thread:$0]  %s0, 1024, %s19, [#allocation3], 256, 256, 16
    $region5: #{tpu_custom_call.1} parent=1 // pred_fallthru
      _
    // Predicated region
    $region6: #{tpu_custom_call.1} parent=1 // pred_check
      _
    $region7: #{tpu_custom_call.1} parent=1 // pred_check_branch
      %26 = sbr.rel (0) target = $region9
    $region8: #{tpu_custom_call.1} parent=1 // pred_region
      %s28 = ssub.s32 24576, 24576
      %29 = vsyncadd [#allocation6], %s28
      %s30 = sshll.u32 [#allocation5], 4
      %s31 = int_to_ptr.vmem [resolvable:$true] %s30
      %36 = dma.hbm_to_vmem [thread:$0]  %s1, 24576, %s31, [#allocation6], 128, 128, 8
    $region9: #{tpu_custom_call.1} parent=1 // pred_fallthru
      _
    // Predicated region
    $region10: #{tpu_custom_call.1} parent=1 // pred_check
      _
    $region11: #{tpu_custom_call.1} parent=1 // pred_check_branch
      %38 = sbr.rel (0) target = $region13
    $region12: #{tpu_custom_call.1} parent=1 // pred_region
      _
    $region13: #{tpu_custom_call.1} parent=1 // pred_fallthru
      _
    // Predicated region
    $region14: #{tpu_custom_call.1} parent=1 // pred_check
      _
    $region15: #{tpu_custom_call.1} parent=1 // pred_check_branch
      %40 = sbr.rel (0) target = $region17
    $region16: #{tpu_custom_call.1} parent=1 // pred_region
      %s42 = ssub.s32 6144, 6144
      %43 = vsyncadd [#allocation6], %s42
      %s44 = sshll.u32 [#allocation7], 4
      %s45 = int_to_ptr.vmem [resolvable:$true] %s44
      %50 = dma.hbm_to_vmem [thread:$0]  %s3, 6144, %s45, [#allocation6], 192, 192, 12
    $region17: #{tpu_custom_call.1} parent=1 // pred_fallthru
      _
    // Predicated region
    $region18: #{tpu_custom_call.1} parent=1 // pred_check
      _
    $region19: #{tpu_custom_call.1} parent=1 // pred_check_branch
      %52 = sbr.rel (0) target = $region21
    $region20: #{tpu_custom_call.1} parent=1 // pred_region
      _
    $region21: #{tpu_custom_call.1} parent=1 // pred_fallthru
      _
    // Predicated region
    $region22: #{tpu_custom_call.1} parent=1 // pred_check
      _
    $region23: #{tpu_custom_call.1} parent=1 // pred_check_branch
      %54 = sbr.rel (0) target = $region25
    $region24: #{tpu_custom_call.1} parent=1 // pred_region
      %55 = dma.done [#allocation3], 1024
    $region25: #{tpu_custom_call.1} parent=1 // pred_fallthru
      _
    // Predicated region
    $region26: #{tpu_custom_call.1} parent=1 // pred_check
      _
    $region27: #{tpu_custom_call.1} parent=1 // pred_check_branch
      %57 = sbr.rel (0) target = $region29
    $region28: #{tpu_custom_call.1} parent=1 // pred_region
      %58 = dma.done [#allocation6], 24576
    $region29: #{tpu_custom_call.1} parent=1 // pred_fallthru
      _
    // Predicated region
    $region30: #{tpu_custom_call.1} parent=1 // pred_check
      _
    $region31: #{tpu_custom_call.1} parent=1 // pred_check_branch
      %60 = sbr.rel (0) target = $region33
    $region32: #{tpu_custom_call.1} parent=1 // pred_region
      %61 = dma.done [#allocation6], 6144
    $region33: #{tpu_custom_call.1} parent=1 // pred_fallthru
      _
    %v63 = vld [vmem:[#allocation2] sm:$0xff]
    %v64 = vld [vmem:[#allocation2 + $0x8] sm:$0xff]
    %v65 = vld [vmem:[#allocation2 + $0x10] sm:$0xff]
    %v66 = vld [vmem:[#allocation2 + $0x18] sm:$0xff]
    %v67 = vld [vmem:[#allocation2 + $0x20] sm:$0xff]
    %v68 = vld [vmem:[#allocation2 + $0x28] sm:$0xff]
    %v69 = vld [vmem:[#allocation2 + $0x30] sm:$0xff]
    %v70 = vld [vmem:[#allocation2 + $0x38] sm:$0xff]
    %v71 = vlaneseq
    %v72 = vshrl.u32 %v71, 7
    %v73 = vadd.s32 %v72, 8
    %v74 = vadd.s32 %v72, 16
    %v75 = vadd.s32 %v72, 24
    %vm76 = vcmp.lt.s32.totalorder %v72, 0
    %v77 = vsub.s32 0, %v72
    %v78 = vsel %vm76, %v77, %v72
    %v79 = vshrl.u32 %v78, 4
    %v80 = vand.u32 %v78, 15
    %v81 = vsub.s32 0, %v80
    %v82 = vsel %vm76, %v81, %v80
    %vm83 = vcmp.lt.s32.totalorder %v73, 0
    %v84 = vsub.s32 0, %v73
    %v85 = vsel %vm83, %v84, %v73
    %v86 = vshrl.u32 %v85, 4
    %v87 = vand.u32 %v85, 15
    %v88 = vsub.s32 0, %v87
    %v89 = vsel %vm83, %v88, %v87
    %vm90 = vcmp.lt.s32.totalorder %v74, 0
    %v91 = vsub.s32 0, %v74
    %v92 = vsel %vm90, %v91, %v74
    %v93 = vshrl.u32 %v92, 4
    %v94 = vand.u32 %v92, 15
    %v95 = vsub.s32 0, %v94
    %v96 = vsel %vm90, %v95, %v94
    %vm97 = vcmp.lt.s32.totalorder %v75, 0
    %v98 = vsub.s32 0, %v75
    %v99 = vsel %vm97, %v98, %v75
    %v100 = vshrl.u32 %v99, 4
    %v101 = vand.u32 %v99, 15
    %v102 = vsub.s32 0, %v101
    %v103 = vsel %vm97, %v102, %v101
    %vm104 = vcmp.ne.s32.totalorder %v82, 0
    %vm105 = vcmp.ne.s32.totalorder %v89, 0
    %vm106 = vcmp.ne.s32.totalorder %v96, 0
    %vm107 = vcmp.ne.s32.totalorder %v103, 0
    %vm108 = vcmp.lt.s32.totalorder %v82, 0
    %vm109 = vcmp.lt.s32.totalorder %v89, 0
    %vm110 = vcmp.lt.s32.totalorder %v96, 0
    %vm111 = vcmp.lt.s32.totalorder %v103, 0
    %vm112 = vmand %vm108, %vm104
    %vm113 = vmand %vm109, %vm105
    %vm114 = vmand %vm110, %vm106
    %vm115 = vmand %vm111, %vm107
    %v116 = vadd.s32 %v82, 16
    %v117 = vadd.s32 %v89, 16
    %v118 = vadd.s32 %v96, 16
    %v119 = vadd.s32 %v103, 16
    %v120 = vsel %vm112, %v116, %v82
    %v121 = vsel %vm113, %v117, %v89
    %v122 = vsel %vm114, %v118, %v96
    %v123 = vsel %vm115, %v119, %v103
    %vm124 = vcmp.eq.s32.totalorder %v120, 0
    %vm125 = vcmp.eq.s32.totalorder %v121, 0
    %vm126 = vcmp.eq.s32.totalorder %v122, 0
    %vm127 = vcmp.eq.s32.totalorder %v123, 0
    %vm128 = vcmp.eq.s32.totalorder %v120, 15
    %vm129 = vcmp.eq.s32.totalorder %v121, 15
    %vm130 = vcmp.eq.s32.totalorder %v122, 15
    %vm131 = vcmp.eq.s32.totalorder %v123, 15
    %v132 = vld [vmem:[#allocation5] sm:$0xff]
    %v133 = vld [vmem:[#allocation5 + $0x8] sm:$0xff]
    %v134 = vld [vmem:[#allocation5 + $0x10] sm:$0xff]
    %v135 = vld [vmem:[#allocation5 + $0x18] sm:$0xff]
    %v136 = vld [vmem:[#allocation5 + $0x20] sm:$0xff]
    %v137 = vld [vmem:[#allocation5 + $0x28] sm:$0xff]
    %v138 = vld [vmem:[#allocation5 + $0x30] sm:$0xff]
    %v139 = vld [vmem:[#allocation5 + $0x38] sm:$0xff]
    %v140 = vld [vmem:[#allocation5 + $0x40] sm:$0xff]
    %v141 = vld [vmem:[#allocation5 + $0x48] sm:$0xff]
    %v142 = vld [vmem:[#allocation5 + $0x50] sm:$0xff]
    %v143 = vld [vmem:[#allocation5 + $0x58] sm:$0xff]
    %v144 = vld [vmem:[#allocation5 + $0x60] sm:$0xff]
    %v145 = vld [vmem:[#allocation5 + $0x68] sm:$0xff]
    %v146 = vld [vmem:[#allocation5 + $0x70] sm:$0xff]
    %v147 = vld [vmem:[#allocation5 + $0x78] sm:$0xff]
    %v148 = vld [vmem:[#allocation5 + $0x80] sm:$0xff]
    %v149 = vld [vmem:[#allocation5 + $0x88] sm:$0xff]
    %v150 = vld [vmem:[#allocation5 + $0x90] sm:$0xff]
    %v151 = vld [vmem:[#allocation5 + $0x98] sm:$0xff]
    %v152 = vld [vmem:[#allocation5 + $0xa0] sm:$0xff]
    %v153 = vld [vmem:[#allocation5 + $0xa8] sm:$0xff]
    %v154 = vld [vmem:[#allocation5 + $0xb0] sm:$0xff]
    %v155 = vld [vmem:[#allocation5 + $0xb8] sm:$0xff]
    %v156 = vld [vmem:[#allocation5 + $0xc0] sm:$0xff]
    %v157 = vld [vmem:[#allocation5 + $0xc8] sm:$0xff]
    %v158 = vld [vmem:[#allocation5 + $0xd0] sm:$0xff]
    %v159 = vld [vmem:[#allocation5 + $0xd8] sm:$0xff]
    %v160 = vld [vmem:[#allocation5 + $0xe0] sm:$0xff]
    %v161 = vld [vmem:[#allocation5 + $0xe8] sm:$0xff]
    %v162 = vld [vmem:[#allocation5 + $0xf0] sm:$0xff]
    %v163 = vld [vmem:[#allocation5 + $0xf8] sm:$0xff]
    %v164 = vld [vmem:[#allocation5 + $0x100] sm:$0xff]
    %v165 = vld [vmem:[#allocation5 + $0x108] sm:$0xff]
    %v166 = vld [vmem:[#allocation5 + $0x110] sm:$0xff]
    %v167 = vld [vmem:[#allocation5 + $0x118] sm:$0xff]
    %v168 = vld [vmem:[#allocation5 + $0x120] sm:$0xff]
    %v169 = vld [vmem:[#allocation5 + $0x128] sm:$0xff]
    %v170 = vld [vmem:[#allocation5 + $0x130] sm:$0xff]
    %v171 = vld [vmem:[#allocation5 + $0x138] sm:$0xff]
    %v172 = vld [vmem:[#allocation5 + $0x140] sm:$0xff]
    %v173 = vld [vmem:[#allocation5 + $0x148] sm:$0xff]
    %v174 = vld [vmem:[#allocation5 + $0x150] sm:$0xff]
    %v175 = vld [vmem:[#allocation5 + $0x158] sm:$0xff]
    %v176 = vld [vmem:[#allocation5 + $0x160] sm:$0xff]
    %v177 = vld [vmem:[#allocation5 + $0x168] sm:$0xff]
    %v178 = vld [vmem:[#allocation5 + $0x170] sm:$0xff]
    %v179 = vld [vmem:[#allocation5 + $0x178] sm:$0xff]
    %v180 = vld [vmem:[#allocation5 + $0x180] sm:$0xff]
    %v181 = vld [vmem:[#allocation5 + $0x188] sm:$0xff]
    %v182 = vld [vmem:[#allocation5 + $0x190] sm:$0xff]
    %v183 = vld [vmem:[#allocation5 + $0x198] sm:$0xff]
    %v184 = vld [vmem:[#allocation5 + $0x1a0] sm:$0xff]
    %v185 = vld [vmem:[#allocation5 + $0x1a8] sm:$0xff]
    %v186 = vld [vmem:[#allocation5 + $0x1b0] sm:$0xff]
    %v187 = vld [vmem:[#allocation5 + $0x1b8] sm:$0xff]
    %v188 = vld [vmem:[#allocation5 + $0x1c0] sm:$0xff]
    %v189 = vld [vmem:[#allocation5 + $0x1c8] sm:$0xff]
    %v190 = vld [vmem:[#allocation5 + $0x1d0] sm:$0xff]
    %v191 = vld [vmem:[#allocation5 + $0x1d8] sm:$0xff]
    %v192 = vld [vmem:[#allocation5 + $0x1e0] sm:$0xff]
    %v193 = vld [vmem:[#allocation5 + $0x1e8] sm:$0xff]
    %v194 = vld [vmem:[#allocation5 + $0x1f0] sm:$0xff]
    %v195 = vld [vmem:[#allocation5 + $0x1f8] sm:$0xff]
    %v204 = vunpack.c.l.b16 %v63
    %v205 = vunpack.c.h.b16 %v63
    %v206 = vunpack.c.l.b16 %v64
    %v207 = vunpack.c.h.b16 %v64
    %v208 = vunpack.c.l.b16 %v65
    %v209 = vunpack.c.h.b16 %v65
    %v210 = vunpack.c.l.b16 %v66
    %v211 = vunpack.c.h.b16 %v66
    %v212 = vunpack.c.l.b16 %v67
    %v213 = vunpack.c.h.b16 %v67
    %v214 = vunpack.c.l.b16 %v68
    %v215 = vunpack.c.h.b16 %v68
    %v216 = vunpack.c.l.b16 %v69
    %v217 = vunpack.c.h.b16 %v69
    %v218 = vunpack.c.l.b16 %v70
    %v219 = vunpack.c.h.b16 %v70
    %v220 = vpack.c.b16 %v208, %v204
    %v221 = vpack.c.b16 %v209, %v205
    %v222 = vpack.c.b16 %v210, %v206
    %v223 = vpack.c.b16 %v211, %v207
    %v224 = vpack.c.b16 %v216, %v212
    %v225 = vpack.c.b16 %v217, %v213
    %v226 = vpack.c.b16 %v218, %v214
    %v227 = vpack.c.b16 %v219, %v215
    %v300 = vunpack.c.l.b16 %v132
    %v301 = vunpack.c.h.b16 %v132
    %v302 = vunpack.c.l.b16 %v133
    %v303 = vunpack.c.h.b16 %v133
    %v304 = vunpack.c.l.b16 %v134
    %v305 = vunpack.c.h.b16 %v134
    %v306 = vunpack.c.l.b16 %v135
    %v307 = vunpack.c.h.b16 %v135
    %v308 = vunpack.c.l.b16 %v136
    %v309 = vunpack.c.h.b16 %v136
    %v310 = vunpack.c.l.b16 %v137
    %v311 = vunpack.c.h.b16 %v137
    %v312 = vunpack.c.l.b16 %v138
    %v313 = vunpack.c.h.b16 %v138
    %v314 = vunpack.c.l.b16 %v139
    %v315 = vunpack.c.h.b16 %v139
    %v316 = vunpack.c.l.b16 %v140
    %v317 = vunpack.c.h.b16 %v140
    %v318 = vunpack.c.l.b16 %v141
    %v319 = vunpack.c.h.b16 %v141
    %v320 = vunpack.c.l.b16 %v142
    %v321 = vunpack.c.h.b16 %v142
    %v322 = vunpack.c.l.b16 %v143
    %v323 = vunpack.c.h.b16 %v143
    %v324 = vunpack.c.l.b16 %v144
    %v325 = vunpack.c.h.b16 %v144
    %v326 = vunpack.c.l.b16 %v145
    %v327 = vunpack.c.h.b16 %v145
    %v328 = vunpack.c.l.b16 %v146
    %v329 = vunpack.c.h.b16 %v146
    %v330 = vunpack.c.l.b16 %v147
    %v331 = vunpack.c.h.b16 %v147
    %v332 = vunpack.c.l.b16 %v148
    %v333 = vunpack.c.h.b16 %v148
    %v334 = vunpack.c.l.b16 %v149
    %v335 = vunpack.c.h.b16 %v149
    %v336 = vunpack.c.l.b16 %v150
    %v337 = vunpack.c.h.b16 %v150
    %v338 = vunpack.c.l.b16 %v151
    %v339 = vunpack.c.h.b16 %v151
    %v340 = vunpack.c.l.b16 %v152
    %v341 = vunpack.c.h.b16 %v152
    %v342 = vunpack.c.l.b16 %v153
    %v343 = vunpack.c.h.b16 %v153
    %v344 = vunpack.c.l.b16 %v154
    %v345 = vunpack.c.h.b16 %v154
    %v346 = vunpack.c.l.b16 %v155
    %v347 = vunpack.c.h.b16 %v155
    %v348 = vunpack.c.l.b16 %v156
    %v349 = vunpack.c.h.b16 %v156
    %v350 = vunpack.c.l.b16 %v157
    %v351 = vunpack.c.h.b16 %v157
    %v352 = vunpack.c.l.b16 %v158
    %v353 = vunpack.c.h.b16 %v158
    %v354 = vunpack.c.l.b16 %v159
    %v355 = vunpack.c.h.b16 %v159
    %v356 = vunpack.c.l.b16 %v160
    %v357 = vunpack.c.h.b16 %v160
    %v358 = vunpack.c.l.b16 %v161
    %v359 = vunpack.c.h.b16 %v161
    %v360 = vunpack.c.l.b16 %v162
    %v361 = vunpack.c.h.b16 %v162
    %v362 = vunpack.c.l.b16 %v163
    %v363 = vunpack.c.h.b16 %v163
    %v364 = vunpack.c.l.b16 %v164
    %v365 = vunpack.c.h.b16 %v164
    %v366 = vunpack.c.l.b16 %v165
    %v367 = vunpack.c.h.b16 %v165
    %v368 = vunpack.c.l.b16 %v166
    %v369 = vunpack.c.h.b16 %v166
    %v370 = vunpack.c.l.b16 %v167
    %v371 = vunpack.c.h.b16 %v167
    %v372 = vunpack.c.l.b16 %v168
    %v373 = vunpack.c.h.b16 %v168
    %v374 = vunpack.c.l.b16 %v169
    %v375 = vunpack.c.h.b16 %v169
    %v376 = vunpack.c.l.b16 %v170
    %v377 = vunpack.c.h.b16 %v170
    %v378 = vunpack.c.l.b16 %v171
    %v379 = vunpack.c.h.b16 %v171
    %v380 = vunpack.c.l.b16 %v172
    %v381 = vunpack.c.h.b16 %v172
    %v382 = vunpack.c.l.b16 %v173
    %v383 = vunpack.c.h.b16 %v173
    %v384 = vunpack.c.l.b16 %v174
    %v385 = vunpack.c.h.b16 %v174
    %v386 = vunpack.c.l.b16 %v175
    %v387 = vunpack.c.h.b16 %v175
    %v388 = vunpack.c.l.b16 %v176
    %v389 = vunpack.c.h.b16 %v176
    %v390 = vunpack.c.l.b16 %v177
    %v391 = vunpack.c.h.b16 %v177
    %v392 = vunpack.c.l.b16 %v178
    %v393 = vunpack.c.h.b16 %v178
    %v394 = vunpack.c.l.b16 %v179
    %v395 = vunpack.c.h.b16 %v179
    %v396 = vunpack.c.l.b16 %v180
    %v397 = vunpack.c.h.b16 %v180
    %v398 = vunpack.c.l.b16 %v181
    %v399 = vunpack.c.h.b16 %v181
    %v400 = vunpack.c.l.b16 %v182
    %v401 = vunpack.c.h.b16 %v182
    %v402 = vunpack.c.l.b16 %v183
    %v403 = vunpack.c.h.b16 %v183
    %v404 = vunpack.c.l.b16 %v184
    %v405 = vunpack.c.h.b16 %v184
    %v406 = vunpack.c.l.b16 %v185
    %v407 = vunpack.c.h.b16 %v185
    %v408 = vunpack.c.l.b16 %v186
    %v409 = vunpack.c.h.b16 %v186
    %v410 = vunpack.c.l.b16 %v187
    %v411 = vunpack.c.h.b16 %v187
    %v412 = vunpack.c.l.b16 %v188
    %v413 = vunpack.c.h.b16 %v188
    %v414 = vunpack.c.l.b16 %v189
    %v415 = vunpack.c.h.b16 %v189
    %v416 = vunpack.c.l.b16 %v190
    %v417 = vunpack.c.h.b16 %v190
    %v418 = vunpack.c.l.b16 %v191
    %v419 = vunpack.c.h.b16 %v191
    %v420 = vunpack.c.l.b16 %v192
    %v421 = vunpack.c.h.b16 %v192
    %v422 = vunpack.c.l.b16 %v193
    %v423 = vunpack.c.h.b16 %v193
    %v424 = vunpack.c.l.b16 %v194
    %v425 = vunpack.c.h.b16 %v194
    %v426 = vunpack.c.l.b16 %v195
    %v427 = vunpack.c.h.b16 %v195
    %v428 = vpack.c.b16 %v302, %v300
    %v429 = vpack.c.b16 %v303, %v301
    %v430 = vpack.c.b16 %v306, %v304
    %v431 = vpack.c.b16 %v307, %v305
    %v432 = vpack.c.b16 %v310, %v308
    %v433 = vpack.c.b16 %v311, %v309
    %v434 = vpack.c.b16 %v314, %v312
    %v435 = vpack.c.b16 %v315, %v313
    %v436 = vpack.c.b16 %v318, %v316
    %v437 = vpack.c.b16 %v319, %v317
    %v438 = vpack.c.b16 %v322, %v320
    %v439 = vpack.c.b16 %v323, %v321
    %v440 = vpack.c.b16 %v326, %v324
    %v441 = vpack.c.b16 %v327, %v325
    %v442 = vpack.c.b16 %v330, %v328
    %v443 = vpack.c.b16 %v331, %v329
    %v444 = vpack.c.b16 %v334, %v332
    %v445 = vpack.c.b16 %v335, %v333
    %v446 = vpack.c.b16 %v338, %v336
    %v447 = vpack.c.b16 %v339, %v337
    %v448 = vpack.c.b16 %v342, %v340
    %v449 = vpack.c.b16 %v343, %v341
    %v450 = vpack.c.b16 %v346, %v344
    %v451 = vpack.c.b16 %v347, %v345
    %v452 = vpack.c.b16 %v350, %v348
    %v453 = vpack.c.b16 %v351, %v349
    %v454 = vpack.c.b16 %v354, %v352
    %v455 = vpack.c.b16 %v355, %v353
    %v456 = vpack.c.b16 %v358, %v356
    %v457 = vpack.c.b16 %v359, %v357
    %v458 = vpack.c.b16 %v362, %v360
    %v459 = vpack.c.b16 %v363, %v361
    %v460 = vpack.c.b16 %v366, %v364
    %v461 = vpack.c.b16 %v367, %v365
    %v462 = vpack.c.b16 %v370, %v368
    %v463 = vpack.c.b16 %v371, %v369
    %v464 = vpack.c.b16 %v374, %v372
    %v465 = vpack.c.b16 %v375, %v373
    %v466 = vpack.c.b16 %v378, %v376
    %v467 = vpack.c.b16 %v379, %v377
    %v468 = vpack.c.b16 %v382, %v380
    %v469 = vpack.c.b16 %v383, %v381
    %v470 = vpack.c.b16 %v386, %v384
    %v471 = vpack.c.b16 %v387, %v385
    %v472 = vpack.c.b16 %v390, %v388
    %v473 = vpack.c.b16 %v391, %v389
    %v474 = vpack.c.b16 %v394, %v392
    %v475 = vpack.c.b16 %v395, %v393
    %v476 = vpack.c.b16 %v398, %v396
    %v477 = vpack.c.b16 %v399, %v397
    %v478 = vpack.c.b16 %v402, %v400
    %v479 = vpack.c.b16 %v403, %v401
    %v480 = vpack.c.b16 %v406, %v404
    %v481 = vpack.c.b16 %v407, %v405
    %v482 = vpack.c.b16 %v410, %v408
    %v483 = vpack.c.b16 %v411, %v409
    %v484 = vpack.c.b16 %v414, %v412
    %v485 = vpack.c.b16 %v415, %v413
    %v486 = vpack.c.b16 %v418, %v416
    %v487 = vpack.c.b16 %v419, %v417
    %v488 = vpack.c.b16 %v422, %v420
    %v489 = vpack.c.b16 %v423, %v421
    %v490 = vpack.c.b16 %v426, %v424
    %v491 = vpack.c.b16 %v427, %v425
    %556 = vmatprep.subr.bf16.mxu0 %v443
    %557 = vmatpush1.bf16.msra.mxu0 %v442
    %558 = vmatprep.subr.bf16.mxu0 %v441
    %559 = vmatpush1.bf16.msra.mxu0 %v440
    %560 = vmatprep.subr.bf16.mxu0 %v439
    %561 = vmatpush1.bf16.msra.mxu0 %v438
    %562 = vmatprep.subr.bf16.mxu0 %v437
    %563 = vmatpush1.bf16.msra.mxu0 %v436
    %564 = vmatprep.subr.bf16.mxu0 %v435
    %565 = vmatpush1.bf16.msra.mxu0 %v434
    %566 = vmatprep.subr.bf16.mxu0 %v433
    %567 = vmatpush1.bf16.msra.mxu0 %v432
    %568 = vmatprep.subr.bf16.mxu0 %v431
    %569 = vmatpush1.bf16.msra.mxu0 %v430
    %570 = vmatprep.subr.bf16.mxu0 %v429
    %571 = vmatpush1.bf16.msra.mxu0 %v428
    %572 = vmatprep.subr.bf16.mxu0 %v459
    %573 = vmatpush2.bf16.msra.mxu0 %v458
    %574 = vmatprep.subr.bf16.mxu0 %v457
    %575 = vmatpush2.bf16.msra.mxu0 %v456
    %576 = vmatprep.subr.bf16.mxu0 %v455
    %577 = vmatpush2.bf16.msra.mxu0 %v454
    %578 = vmatprep.subr.bf16.mxu0 %v453
    %579 = vmatpush2.bf16.msra.mxu0 %v452
    %580 = vmatprep.subr.bf16.mxu0 %v451
    %581 = vmatpush2.bf16.msra.mxu0 %v450
    %582 = vmatprep.subr.bf16.mxu0 %v449
    %583 = vmatpush2.bf16.msra.mxu0 %v448
    %584 = vmatprep.subr.bf16.mxu0 %v447
    %585 = vmatpush2.bf16.msra.mxu0 %v446
    %586 = vmatprep.subr.bf16.mxu0 %v445
    %587 = vmatpush2.bf16.msra.mxu0 %v444
    %588 = vmatprep.mubr.bf16.mxu0 %v221
    %589 = vmatmul.mubr.bf16.gmra.mxu0 %v220
    %v590 = vpop.f32.mrf.mxu0
    %v591 = vadd.f32 0.0, %v590
    %v592 = vpop.f32.mrf.mxu0
    %v593 = vadd.f32 0.0, %v592
    %v594 = vpop.f32.mrf.mxu0
    %v595 = vadd.f32 0.0, %v594
    %v596 = vpop.f32.mrf.mxu0
    %v597 = vadd.f32 0.0, %v596
    %598 = vmatprep.mubr.bf16.mxu0 %v225
    %599 = vmatmul.mubr.bf16.gmra.mxu0 %v224
    %v600 = vpop.f32.mrf.mxu0
    %v601 = vadd.f32 0.0, %v600
    %v602 = vpop.f32.mrf.mxu0
    %v603 = vadd.f32 0.0, %v602
    %v604 = vpop.f32.mrf.mxu0
    %v605 = vadd.f32 0.0, %v604
    %v606 = vpop.f32.mrf.mxu0
    %v607 = vadd.f32 0.0, %v606
    %608 = vdwg.mxu0
    %609 = vmatprep.subr.bf16.mxu0 %v475
    %610 = vmatpush1.bf16.msra.mxu0 %v474
    %611 = vmatprep.subr.bf16.mxu0 %v473
    %612 = vmatpush1.bf16.msra.mxu0 %v472
    %613 = vmatprep.subr.bf16.mxu0 %v471
    %614 = vmatpush1.bf16.msra.mxu0 %v470
    %615 = vmatprep.subr.bf16.mxu0 %v469
    %616 = vmatpush1.bf16.msra.mxu0 %v468
    %617 = vmatprep.subr.bf16.mxu0 %v467
    %618 = vmatpush1.bf16.msra.mxu0 %v466
    %619 = vmatprep.subr.bf16.mxu0 %v465
    %620 = vmatpush1.bf16.msra.mxu0 %v464
    %621 = vmatprep.subr.bf16.mxu0 %v463
    %622 = vmatpush1.bf16.msra.mxu0 %v462
    %623 = vmatprep.subr.bf16.mxu0 %v461
    %624 = vmatpush1.bf16.msra.mxu0 %v460
    %625 = vmatprep.subr.bf16.mxu0 %v491
    %626 = vmatpush2.bf16.msra.mxu0 %v490
    %627 = vmatprep.subr.bf16.mxu0 %v489
    %628 = vmatpush2.bf16.msra.mxu0 %v488
    %629 = vmatprep.subr.bf16.mxu0 %v487
    %630 = vmatpush2.bf16.msra.mxu0 %v486
    %631 = vmatprep.subr.bf16.mxu0 %v485
    %632 = vmatpush2.bf16.msra.mxu0 %v484
    %633 = vmatprep.subr.bf16.mxu0 %v483
    %634 = vmatpush2.bf16.msra.mxu0 %v482
    %635 = vmatprep.subr.bf16.mxu0 %v481
    %636 = vmatpush2.bf16.msra.mxu0 %v480
    %637 = vmatprep.subr.bf16.mxu0 %v479
    %638 = vmatpush2.bf16.msra.mxu0 %v478
    %639 = vmatprep.subr.bf16.mxu0 %v477
    %640 = vmatpush2.bf16.msra.mxu0 %v476
    %641 = vmatprep.mubr.bf16.mxu0 %v223
    %642 = vmatmul.mubr.bf16.gmra.mxu0 %v222
    %v643 = vpop.f32.mrf.mxu0
    %v644 = vadd.f32 %v591, %v643
    %v645 = vpop.f32.mrf.mxu0
    %v646 = vadd.f32 %v593, %v645
    %v647 = vpop.f32.mrf.mxu0
    %v648 = vadd.f32 %v595, %v647
    %v649 = vpop.f32.mrf.mxu0
    %v650 = vadd.f32 %v597, %v649
    %651 = vmatprep.mubr.bf16.mxu0 %v227
    %652 = vmatmul.mubr.bf16.gmra.mxu0 %v226
    %v653 = vpop.f32.mrf.mxu0
    %v654 = vadd.f32 %v601, %v653
    %v655 = vpop.f32.mrf.mxu0
    %v656 = vadd.f32 %v603, %v655
    %v657 = vpop.f32.mrf.mxu0
    %v658 = vadd.f32 %v605, %v657
    %v659 = vpop.f32.mrf.mxu0
    %v660 = vadd.f32 %v607, %v659
    %661 = vdwg.mxu0
    %s662 = scalar_lea.vmem [#allocation5], 512
    %v663 = vld [vmem:[%s662] sm:$0xff]
    %v664 = vld [vmem:[%s662 + $0x8] sm:$0xff]
    %v665 = vld [vmem:[%s662 + $0x10] sm:$0xff]
    %v666 = vld [vmem:[%s662 + $0x18] sm:$0xff]
    %v667 = vld [vmem:[%s662 + $0x20] sm:$0xff]
    %v668 = vld [vmem:[%s662 + $0x28] sm:$0xff]
    %v669 = vld [vmem:[%s662 + $0x30] sm:$0xff]
    %v670 = vld [vmem:[%s662 + $0x38] sm:$0xff]
    %v671 = vld [vmem:[%s662 + $0x40] sm:$0xff]
    %v672 = vld [vmem:[%s662 + $0x48] sm:$0xff]
    %v673 = vld [vmem:[%s662 + $0x50] sm:$0xff]
    %v674 = vld [vmem:[%s662 + $0x58] sm:$0xff]
    %v675 = vld [vmem:[%s662 + $0x60] sm:$0xff]
    %v676 = vld [vmem:[%s662 + $0x68] sm:$0xff]
    %v677 = vld [vmem:[%s662 + $0x70] sm:$0xff]
    %v678 = vld [vmem:[%s662 + $0x78] sm:$0xff]
    %v679 = vld [vmem:[%s662 + $0x80] sm:$0xff]
    %v680 = vld [vmem:[%s662 + $0x88] sm:$0xff]
    %v681 = vld [vmem:[%s662 + $0x90] sm:$0xff]
    %v682 = vld [vmem:[%s662 + $0x98] sm:$0xff]
    %v683 = vld [vmem:[%s662 + $0xa0] sm:$0xff]
    %v684 = vld [vmem:[%s662 + $0xa8] sm:$0xff]
    %v685 = vld [vmem:[%s662 + $0xb0] sm:$0xff]
    %v686 = vld [vmem:[%s662 + $0xb8] sm:$0xff]
    %v687 = vld [vmem:[%s662 + $0xc0] sm:$0xff]
    %v688 = vld [vmem:[%s662 + $0xc8] sm:$0xff]
    %v689 = vld [vmem:[%s662 + $0xd0] sm:$0xff]
    %v690 = vld [vmem:[%s662 + $0xd8] sm:$0xff]
    %v691 = vld [vmem:[%s662 + $0xe0] sm:$0xff]
    %v692 = vld [vmem:[%s662 + $0xe8] sm:$0xff]
    %v693 = vld [vmem:[%s662 + $0xf0] sm:$0xff]
    %v694 = vld [vmem:[%s662 + $0xf8] sm:$0xff]
    %v695 = vld [vmem:[%s662 + $0x100] sm:$0xff]
    %v696 = vld [vmem:[%s662 + $0x108] sm:$0xff]
    %v697 = vld [vmem:[%s662 + $0x110] sm:$0xff]
    %v698 = vld [vmem:[%s662 + $0x118] sm:$0xff]
    %v699 = vld [vmem:[%s662 + $0x120] sm:$0xff]
    %v700 = vld [vmem:[%s662 + $0x128] sm:$0xff]
    %v701 = vld [vmem:[%s662 + $0x130] sm:$0xff]
    %v702 = vld [vmem:[%s662 + $0x138] sm:$0xff]
    %v703 = vld [vmem:[%s662 + $0x140] sm:$0xff]
    %v704 = vld [vmem:[%s662 + $0x148] sm:$0xff]
    %v705 = vld [vmem:[%s662 + $0x150] sm:$0xff]
    %v706 = vld [vmem:[%s662 + $0x158] sm:$0xff]
    %v707 = vld [vmem:[%s662 + $0x160] sm:$0xff]
    %v708 = vld [vmem:[%s662 + $0x168] sm:$0xff]
    %v709 = vld [vmem:[%s662 + $0x170] sm:$0xff]
    %v710 = vld [vmem:[%s662 + $0x178] sm:$0xff]
    %v711 = vld [vmem:[%s662 + $0x180] sm:$0xff]
    %v712 = vld [vmem:[%s662 + $0x188] sm:$0xff]
    %v713 = vld [vmem:[%s662 + $0x190] sm:$0xff]
    %v714 = vld [vmem:[%s662 + $0x198] sm:$0xff]
    %v715 = vld [vmem:[%s662 + $0x1a0] sm:$0xff]
    %v716 = vld [vmem:[%s662 + $0x1a8] sm:$0xff]
    %v717 = vld [vmem:[%s662 + $0x1b0] sm:$0xff]
    %v718 = vld [vmem:[%s662 + $0x1b8] sm:$0xff]
    %v719 = vld [vmem:[%s662 + $0x1c0] sm:$0xff]
    %v720 = vld [vmem:[%s662 + $0x1c8] sm:$0xff]
    %v721 = vld [vmem:[%s662 + $0x1d0] sm:$0xff]
    %v722 = vld [vmem:[%s662 + $0x1d8] sm:$0xff]
    %v723 = vld [vmem:[%s662 + $0x1e0] sm:$0xff]
    %v724 = vld [vmem:[%s662 + $0x1e8] sm:$0xff]
    %v725 = vld [vmem:[%s662 + $0x1f0] sm:$0xff]
    %v726 = vld [vmem:[%s662 + $0x1f8] sm:$0xff]
    %v791 = vunpack.c.l.b16 %v663
    %v792 = vunpack.c.h.b16 %v663
    %v793 = vunpack.c.l.b16 %v664
    %v794 = vunpack.c.h.b16 %v664
    %v795 = vunpack.c.l.b16 %v665
    %v796 = vunpack.c.h.b16 %v665
    %v797 = vunpack.c.l.b16 %v666
    %v798 = vunpack.c.h.b16 %v666
    %v799 = vunpack.c.l.b16 %v667
    %v800 = vunpack.c.h.b16 %v667
    %v801 = vunpack.c.l.b16 %v668
    %v802 = vunpack.c.h.b16 %v668
    %v803 = vunpack.c.l.b16 %v669
    %v804 = vunpack.c.h.b16 %v669
    %v805 = vunpack.c.l.b16 %v670
    %v806 = vunpack.c.h.b16 %v670
    %v807 = vunpack.c.l.b16 %v671
    %v808 = vunpack.c.h.b16 %v671
    %v809 = vunpack.c.l.b16 %v672
    %v810 = vunpack.c.h.b16 %v672
    %v811 = vunpack.c.l.b16 %v673
    %v812 = vunpack.c.h.b16 %v673
    %v813 = vunpack.c.l.b16 %v674
    %v814 = vunpack.c.h.b16 %v674
    %v815 = vunpack.c.l.b16 %v675
    %v816 = vunpack.c.h.b16 %v675
    %v817 = vunpack.c.l.b16 %v676
    %v818 = vunpack.c.h.b16 %v676
    %v819 = vunpack.c.l.b16 %v677
    %v820 = vunpack.c.h.b16 %v677
    %v821 = vunpack.c.l.b16 %v678
    %v822 = vunpack.c.h.b16 %v678
    %v823 = vunpack.c.l.b16 %v679
    %v824 = vunpack.c.h.b16 %v679
    %v825 = vunpack.c.l.b16 %v680
    %v826 = vunpack.c.h.b16 %v680
    %v827 = vunpack.c.l.b16 %v681
    %v828 = vunpack.c.h.b16 %v681
    %v829 = vunpack.c.l.b16 %v682
    %v830 = vunpack.c.h.b16 %v682
    %v831 = vunpack.c.l.b16 %v683
    %v832 = vunpack.c.h.b16 %v683
    %v833 = vunpack.c.l.b16 %v684
    %v834 = vunpack.c.h.b16 %v684
    %v835 = vunpack.c.l.b16 %v685
    %v836 = vunpack.c.h.b16 %v685
    %v837 = vunpack.c.l.b16 %v686
    %v838 = vunpack.c.h.b16 %v686
    %v839 = vunpack.c.l.b16 %v687
    %v840 = vunpack.c.h.b16 %v687
    %v841 = vunpack.c.l.b16 %v688
    %v842 = vunpack.c.h.b16 %v688
    %v843 = vunpack.c.l.b16 %v689
    %v844 = vunpack.c.h.b16 %v689
    %v845 = vunpack.c.l.b16 %v690
    %v846 = vunpack.c.h.b16 %v690
    %v847 = vunpack.c.l.b16 %v691
    %v848 = vunpack.c.h.b16 %v691
    %v849 = vunpack.c.l.b16 %v692
    %v850 = vunpack.c.h.b16 %v692
    %v851 = vunpack.c.l.b16 %v693
    %v852 = vunpack.c.h.b16 %v693
    %v853 = vunpack.c.l.b16 %v694
    %v854 = vunpack.c.h.b16 %v694
    %v855 = vunpack.c.l.b16 %v695
    %v856 = vunpack.c.h.b16 %v695
    %v857 = vunpack.c.l.b16 %v696
    %v858 = vunpack.c.h.b16 %v696
    %v859 = vunpack.c.l.b16 %v697
    %v860 = vunpack.c.h.b16 %v697
    %v861 = vunpack.c.l.b16 %v698
    %v862 = vunpack.c.h.b16 %v698
    %v863 = vunpack.c.l.b16 %v699
    %v864 = vunpack.c.h.b16 %v699
    %v865 = vunpack.c.l.b16 %v700
    %v866 = vunpack.c.h.b16 %v700
    %v867 = vunpack.c.l.b16 %v701
    %v868 = vunpack.c.h.b16 %v701
    %v869 = vunpack.c.l.b16 %v702
    %v870 = vunpack.c.h.b16 %v702
    %v871 = vunpack.c.l.b16 %v703
    %v872 = vunpack.c.h.b16 %v703
    %v873 = vunpack.c.l.b16 %v704
    %v874 = vunpack.c.h.b16 %v704
    %v875 = vunpack.c.l.b16 %v705
    %v876 = vunpack.c.h.b16 %v705
    %v877 = vunpack.c.l.b16 %v706
    %v878 = vunpack.c.h.b16 %v706
    %v879 = vunpack.c.l.b16 %v707
    %v880 = vunpack.c.h.b16 %v707
    %v881 = vunpack.c.l.b16 %v708
    %v882 = vunpack.c.h.b16 %v708
    %v883 = vunpack.c.l.b16 %v709
    %v884 = vunpack.c.h.b16 %v709
    %v885 = vunpack.c.l.b16 %v710
    %v886 = vunpack.c.h.b16 %v710
    %v887 = vunpack.c.l.b16 %v711
    %v888 = vunpack.c.h.b16 %v711
    %v889 = vunpack.c.l.b16 %v712
    %v890 = vunpack.c.h.b16 %v712
    %v891 = vunpack.c.l.b16 %v713
    %v892 = vunpack.c.h.b16 %v713
    %v893 = vunpack.c.l.b16 %v714
    %v894 = vunpack.c.h.b16 %v714
    %v895 = vunpack.c.l.b16 %v715
    %v896 = vunpack.c.h.b16 %v715
    %v897 = vunpack.c.l.b16 %v716
    %v898 = vunpack.c.h.b16 %v716
    %v899 = vunpack.c.l.b16 %v717
    %v900 = vunpack.c.h.b16 %v717
    %v901 = vunpack.c.l.b16 %v718
    %v902 = vunpack.c.h.b16 %v718
    %v903 = vunpack.c.l.b16 %v719
    %v904 = vunpack.c.h.b16 %v719
    %v905 = vunpack.c.l.b16 %v720
    %v906 = vunpack.c.h.b16 %v720
    %v907 = vunpack.c.l.b16 %v721
    %v908 = vunpack.c.h.b16 %v721
    %v909 = vunpack.c.l.b16 %v722
    %v910 = vunpack.c.h.b16 %v722
    %v911 = vunpack.c.l.b16 %v723
    %v912 = vunpack.c.h.b16 %v723
    %v913 = vunpack.c.l.b16 %v724
    %v914 = vunpack.c.h.b16 %v724
    %v915 = vunpack.c.l.b16 %v725
    %v916 = vunpack.c.h.b16 %v725
    %v917 = vunpack.c.l.b16 %v726
    %v918 = vunpack.c.h.b16 %v726
    %v919 = vpack.c.b16 %v793, %v791
    %v920 = vpack.c.b16 %v794, %v792
    %v921 = vpack.c.b16 %v797, %v795
    %v922 = vpack.c.b16 %v798, %v796
    %v923 = vpack.c.b16 %v801, %v799
    %v924 = vpack.c.b16 %v802, %v800
    %v925 = vpack.c.b16 %v805, %v803
    %v926 = vpack.c.b16 %v806, %v804
    %v927 = vpack.c.b16 %v809, %v807
    %v928 = vpack.c.b16 %v810, %v808
    %v929 = vpack.c.b16 %v813, %v811
    %v930 = vpack.c.b16 %v814, %v812
    %v931 = vpack.c.b16 %v817, %v815
    %v932 = vpack.c.b16 %v818, %v816
    %v933 = vpack.c.b16 %v821, %v819
    %v934 = vpack.c.b16 %v822, %v820
    %v935 = vpack.c.b16 %v825, %v823
    %v936 = vpack.c.b16 %v826, %v824
    %v937 = vpack.c.b16 %v829, %v827
    %v938 = vpack.c.b16 %v830, %v828
    %v939 = vpack.c.b16 %v833, %v831
    %v940 = vpack.c.b16 %v834, %v832
    %v941 = vpack.c.b16 %v837, %v835
    %v942 = vpack.c.b16 %v838, %v836
    %v943 = vpack.c.b16 %v841, %v839
    %v944 = vpack.c.b16 %v842, %v840
    %v945 = vpack.c.b16 %v845, %v843
    %v946 = vpack.c.b16 %v846, %v844
    %v947 = vpack.c.b16 %v849, %v847
    %v948 = vpack.c.b16 %v850, %v848
    %v949 = vpack.c.b16 %v853, %v851
    %v950 = vpack.c.b16 %v854, %v852
    %v951 = vpack.c.b16 %v857, %v855
    %v952 = vpack.c.b16 %v858, %v856
    %v953 = vpack.c.b16 %v861, %v859
    %v954 = vpack.c.b16 %v862, %v860
    %v955 = vpack.c.b16 %v865, %v863
    %v956 = vpack.c.b16 %v866, %v864
    %v957 = vpack.c.b16 %v869, %v867
    %v958 = vpack.c.b16 %v870, %v868
    %v959 = vpack.c.b16 %v873, %v871
    %v960 = vpack.c.b16 %v874, %v872
    %v961 = vpack.c.b16 %v877, %v875
    %v962 = vpack.c.b16 %v878, %v876
    %v963 = vpack.c.b16 %v881, %v879
    %v964 = vpack.c.b16 %v882, %v880
    %v965 = vpack.c.b16 %v885, %v883
    %v966 = vpack.c.b16 %v886, %v884
    %v967 = vpack.c.b16 %v889, %v887
    %v968 = vpack.c.b16 %v890, %v888
    %v969 = vpack.c.b16 %v893, %v891
    %v970 = vpack.c.b16 %v894, %v892
    %v971 = vpack.c.b16 %v897, %v895
    %v972 = vpack.c.b16 %v898, %v896
    %v973 = vpack.c.b16 %v901, %v899
    %v974 = vpack.c.b16 %v902, %v900
    %v975 = vpack.c.b16 %v905, %v903
    %v976 = vpack.c.b16 %v906, %v904
    %v977 = vpack.c.b16 %v909, %v907
    %v978 = vpack.c.b16 %v910, %v908
    %v979 = vpack.c.b16 %v913, %v911
    %v980 = vpack.c.b16 %v914, %v912
    %v981 = vpack.c.b16 %v917, %v915
    %v982 = vpack.c.b16 %v918, %v916
    %1047 = vmatprep.subr.bf16.mxu0 %v934
    %1048 = vmatpush1.bf16.msra.mxu0 %v933
    %1049 = vmatprep.subr.bf16.mxu0 %v932
    %1050 = vmatpush1.bf16.msra.mxu0 %v931
    %1051 = vmatprep.subr.bf16.mxu0 %v930
    %1052 = vmatpush1.bf16.msra.mxu0 %v929
    %1053 = vmatprep.subr.bf16.mxu0 %v928
    %1054 = vmatpush1.bf16.msra.mxu0 %v927
    %1055 = vmatprep.subr.bf16.mxu0 %v926
    %1056 = vmatpush1.bf16.msra.mxu0 %v925
    %1057 = vmatprep.subr.bf16.mxu0 %v924
    %1058 = vmatpush1.bf16.msra.mxu0 %v923
    %1059 = vmatprep.subr.bf16.mxu0 %v922
    %1060 = vmatpush1.bf16.msra.mxu0 %v921
    %1061 = vmatprep.subr.bf16.mxu0 %v920
    %1062 = vmatpush1.bf16.msra.mxu0 %v919
    %1063 = vmatprep.subr.bf16.mxu0 %v950
    %1064 = vmatpush2.bf16.msra.mxu0 %v949
    %1065 = vmatprep.subr.bf16.mxu0 %v948
    %1066 = vmatpush2.bf16.msra.mxu0 %v947
    %1067 = vmatprep.subr.bf16.mxu0 %v946
    %1068 = vmatpush2.bf16.msra.mxu0 %v945
    %1069 = vmatprep.subr.bf16.mxu0 %v944
    %1070 = vmatpush2.bf16.msra.mxu0 %v943
    %1071 = vmatprep.subr.bf16.mxu0 %v942
    %1072 = vmatpush2.bf16.msra.mxu0 %v941
    %1073 = vmatprep.subr.bf16.mxu0 %v940
    %1074 = vmatpush2.bf16.msra.mxu0 %v939
    %1075 = vmatprep.subr.bf16.mxu0 %v938
    %1076 = vmatpush2.bf16.msra.mxu0 %v937
    %1077 = vmatprep.subr.bf16.mxu0 %v936
    %1078 = vmatpush2.bf16.msra.mxu0 %v935
    %1079 = vmatprep.mubr.bf16.mxu0 %v221
    %1080 = vmatmul.mubr.bf16.gmra.mxu0 %v220
    %v1081 = vpop.f32.mrf.mxu0
    %v1082 = vadd.f32 0.0, %v1081
    %v1083 = vpop.f32.mrf.mxu0
    %v1084 = vadd.f32 0.0, %v1083
    %v1085 = vpop.f32.mrf.mxu0
    %v1086 = vadd.f32 0.0, %v1085
    %v1087 = vpop.f32.mrf.mxu0
    %v1088 = vadd.f32 0.0, %v1087
    %1089 = vmatprep.mubr.bf16.mxu0 %v225
    %1090 = vmatmul.mubr.bf16.gmra.mxu0 %v224
    %v1091 = vpop.f32.mrf.mxu0
    %v1092 = vadd.f32 0.0, %v1091
    %v1093 = vpop.f32.mrf.mxu0
    %v1094 = vadd.f32 0.0, %v1093
    %v1095 = vpop.f32.mrf.mxu0
    %v1096 = vadd.f32 0.0, %v1095
    %v1097 = vpop.f32.mrf.mxu0
    %v1098 = vadd.f32 0.0, %v1097
    %1099 = vdwg.mxu0
    %1100 = vmatprep.subr.bf16.mxu0 %v966
    %1101 = vmatpush1.bf16.msra.mxu0 %v965
    %1102 = vmatprep.subr.bf16.mxu0 %v964
    %1103 = vmatpush1.bf16.msra.mxu0 %v963
    %1104 = vmatprep.subr.bf16.mxu0 %v962
    %1105 = vmatpush1.bf16.msra.mxu0 %v961
    %1106 = vmatprep.subr.bf16.mxu0 %v960
    %1107 = vmatpush1.bf16.msra.mxu0 %v959
    %1108 = vmatprep.subr.bf16.mxu0 %v958
    %1109 = vmatpush1.bf16.msra.mxu0 %v957
    %1110 = vmatprep.subr.bf16.mxu0 %v956
    %1111 = vmatpush1.bf16.msra.mxu0 %v955
    %1112 = vmatprep.subr.bf16.mxu0 %v954
    %1113 = vmatpush1.bf16.msra.mxu0 %v953
    %1114 = vmatprep.subr.bf16.mxu0 %v952
    %1115 = vmatpush1.bf16.msra.mxu0 %v951
    %1116 = vmatprep.subr.bf16.mxu0 %v982
    %1117 = vmatpush2.bf16.msra.mxu0 %v981
    %1118 = vmatprep.subr.bf16.mxu0 %v980
    %1119 = vmatpush2.bf16.msra.mxu0 %v979
    %1120 = vmatprep.subr.bf16.mxu0 %v978
    %1121 = vmatpush2.bf16.msra.mxu0 %v977
    %1122 = vmatprep.subr.bf16.mxu0 %v976
    %1123 = vmatpush2.bf16.msra.mxu0 %v975
    %1124 = vmatprep.subr.bf16.mxu0 %v974
    %1125 = vmatpush2.bf16.msra.mxu0 %v973
    %1126 = vmatprep.subr.bf16.mxu0 %v972
    %1127 = vmatpush2.bf16.msra.mxu0 %v971
    %1128 = vmatprep.subr.bf16.mxu0 %v970
    %1129 = vmatpush2.bf16.msra.mxu0 %v969
    %1130 = vmatprep.subr.bf16.mxu0 %v968
    %1131 = vmatpush2.bf16.msra.mxu0 %v967
    %1132 = vmatprep.mubr.bf16.mxu0 %v223
    %1133 = vmatmul.mubr.bf16.gmra.mxu0 %v222
    %v1134 = vpop.f32.mrf.mxu0
    %v1135 = vadd.f32 %v1082, %v1134
    %v1136 = vpop.f32.mrf.mxu0
    %v1137 = vadd.f32 %v1084, %v1136
    %v1138 = vpop.f32.mrf.mxu0
    %v1139 = vadd.f32 %v1086, %v1138
    %v1140 = vpop.f32.mrf.mxu0
    %v1141 = vadd.f32 %v1088, %v1140
    %1142 = vmatprep.mubr.bf16.mxu0 %v227
    %1143 = vmatmul.mubr.bf16.gmra.mxu0 %v226
    %v1144 = vpop.f32.mrf.mxu0
    %v1145 = vadd.f32 %v1092, %v1144
    %v1146 = vpop.f32.mrf.mxu0
    %v1147 = vadd.f32 %v1094, %v1146
    %v1148 = vpop.f32.mrf.mxu0
    %v1149 = vadd.f32 %v1096, %v1148
    %v1150 = vpop.f32.mrf.mxu0
    %v1151 = vadd.f32 %v1098, %v1150
    %1152 = vdwg.mxu0
    %s1153 = scalar_lea.vmem [#allocation5], 1024
    %v1154 = vld [vmem:[%s1153] sm:$0xff]
    %v1155 = vld [vmem:[%s1153 + $0x8] sm:$0xff]
    %v1156 = vld [vmem:[%s1153 + $0x10] sm:$0xff]
    %v1157 = vld [vmem:[%s1153 + $0x18] sm:$0xff]
    %v1158 = vld [vmem:[%s1153 + $0x20] sm:$0xff]
    %v1159 = vld [vmem:[%s1153 + $0x28] sm:$0xff]
    %v1160 = vld [vmem:[%s1153 + $0x30] sm:$0xff]
    %v1161 = vld [vmem:[%s1153 + $0x38] sm:$0xff]
    %v1162 = vld [vmem:[%s1153 + $0x40] sm:$0xff]
    %v1163 = vld [vmem:[%s1153 + $0x48] sm:$0xff]
    %v1164 = vld [vmem:[%s1153 + $0x50] sm:$0xff]
    %v1165 = vld [vmem:[%s1153 + $0x58] sm:$0xff]
    %v1166 = vld [vmem:[%s1153 + $0x60] sm:$0xff]
    %v1167 = vld [vmem:[%s1153 + $0x68] sm:$0xff]
    %v1168 = vld [vmem:[%s1153 + $0x70] sm:$0xff]
    %v1169 = vld [vmem:[%s1153 + $0x78] sm:$0xff]
    %v1170 = vld [vmem:[%s1153 + $0x80] sm:$0xff]
    %v1171 = vld [vmem:[%s1153 + $0x88] sm:$0xff]
    %v1172 = vld [vmem:[%s1153 + $0x90] sm:$0xff]
    %v1173 = vld [vmem:[%s1153 + $0x98] sm:$0xff]
    %v1174 = vld [vmem:[%s1153 + $0xa0] sm:$0xff]
    %v1175 = vld [vmem:[%s1153 + $0xa8] sm:$0xff]
    %v1176 = vld [vmem:[%s1153 + $0xb0] sm:$0xff]
    %v1177 = vld [vmem:[%s1153 + $0xb8] sm:$0xff]
    %v1178 = vld [vmem:[%s1153 + $0xc0] sm:$0xff]
    %v1179 = vld [vmem:[%s1153 + $0xc8] sm:$0xff]
    %v1180 = vld [vmem:[%s1153 + $0xd0] sm:$0xff]
    %v1181 = vld [vmem:[%s1153 + $0xd8] sm:$0xff]
    %v1182 = vld [vmem:[%s1153 + $0xe0] sm:$0xff]
    %v1183 = vld [vmem:[%s1153 + $0xe8] sm:$0xff]
    %v1184 = vld [vmem:[%s1153 + $0xf0] sm:$0xff]
    %v1185 = vld [vmem:[%s1153 + $0xf8] sm:$0xff]
    %v1186 = vld [vmem:[%s1153 + $0x100] sm:$0xff]
    %v1187 = vld [vmem:[%s1153 + $0x108] sm:$0xff]
    %v1188 = vld [vmem:[%s1153 + $0x110] sm:$0xff]
    %v1189 = vld [vmem:[%s1153 + $0x118] sm:$0xff]
    %v1190 = vld [vmem:[%s1153 + $0x120] sm:$0xff]
    %v1191 = vld [vmem:[%s1153 + $0x128] sm:$0xff]
    %v1192 = vld [vmem:[%s1153 + $0x130] sm:$0xff]
    %v1193 = vld [vmem:[%s1153 + $0x138] sm:$0xff]
    %v1194 = vld [vmem:[%s1153 + $0x140] sm:$0xff]
    %v1195 = vld [vmem:[%s1153 + $0x148] sm:$0xff]
    %v1196 = vld [vmem:[%s1153 + $0x150] sm:$0xff]
    %v1197 = vld [vmem:[%s1153 + $0x158] sm:$0xff]
    %v1198 = vld [vmem:[%s1153 + $0x160] sm:$0xff]
    %v1199 = vld [vmem:[%s1153 + $0x168] sm:$0xff]
    %v1200 = vld [vmem:[%s1153 + $0x170] sm:$0xff]
    %v1201 = vld [vmem:[%s1153 + $0x178] sm:$0xff]
    %v1202 = vld [vmem:[%s1153 + $0x180] sm:$0xff]
    %v1203 = vld [vmem:[%s1153 + $0x188] sm:$0xff]
    %v1204 = vld [vmem:[%s1153 + $0x190] sm:$0xff]
    %v1205 = vld [vmem:[%s1153 + $0x198] sm:$0xff]
    %v1206 = vld [vmem:[%s1153 + $0x1a0] sm:$0xff]
    %v1207 = vld [vmem:[%s1153 + $0x1a8] sm:$0xff]
    %v1208 = vld [vmem:[%s1153 + $0x1b0] sm:$0xff]
    %v1209 = vld [vmem:[%s1153 + $0x1b8] sm:$0xff]
    %v1210 = vld [vmem:[%s1153 + $0x1c0] sm:$0xff]
    %v1211 = vld [vmem:[%s1153 + $0x1c8] sm:$0xff]
    %v1212 = vld [vmem:[%s1153 + $0x1d0] sm:$0xff]
    %v1213 = vld [vmem:[%s1153 + $0x1d8] sm:$0xff]
    %v1214 = vld [vmem:[%s1153 + $0x1e0] sm:$0xff]
    %v1215 = vld [vmem:[%s1153 + $0x1e8] sm:$0xff]
    %v1216 = vld [vmem:[%s1153 + $0x1f0] sm:$0xff]
    %v1217 = vld [vmem:[%s1153 + $0x1f8] sm:$0xff]
    %v1282 = vunpack.c.l.b16 %v1154
    %v1283 = vunpack.c.h.b16 %v1154
    %v1284 = vunpack.c.l.b16 %v1155
    %v1285 = vunpack.c.h.b16 %v1155
    %v1286 = vunpack.c.l.b16 %v1156
    %v1287 = vunpack.c.h.b16 %v1156
    %v1288 = vunpack.c.l.b16 %v1157
    %v1289 = vunpack.c.h.b16 %v1157
    %v1290 = vunpack.c.l.b16 %v1158
    %v1291 = vunpack.c.h.b16 %v1158
    %v1292 = vunpack.c.l.b16 %v1159
    %v1293 = vunpack.c.h.b16 %v1159
    %v1294 = vunpack.c.l.b16 %v1160
    %v1295 = vunpack.c.h.b16 %v1160
    %v1296 = vunpack.c.l.b16 %v1161
    %v1297 = vunpack.c.h.b16 %v1161
    %v1298 = vunpack.c.l.b16 %v1162
    %v1299 = vunpack.c.h.b16 %v1162
    %v1300 = vunpack.c.l.b16 %v1163
    %v1301 = vunpack.c.h.b16 %v1163
    %v1302 = vunpack.c.l.b16 %v1164
    %v1303 = vunpack.c.h.b16 %v1164
    %v1304 = vunpack.c.l.b16 %v1165
    %v1305 = vunpack.c.h.b16 %v1165
    %v1306 = vunpack.c.l.b16 %v1166
    %v1307 = vunpack.c.h.b16 %v1166
    %v1308 = vunpack.c.l.b16 %v1167
    %v1309 = vunpack.c.h.b16 %v1167
    %v1310 = vunpack.c.l.b16 %v1168
    %v1311 = vunpack.c.h.b16 %v1168
    %v1312 = vunpack.c.l.b16 %v1169
    %v1313 = vunpack.c.h.b16 %v1169
    %v1314 = vunpack.c.l.b16 %v1170
    %v1315 = vunpack.c.h.b16 %v1170
    %v1316 = vunpack.c.l.b16 %v1171
    %v1317 = vunpack.c.h.b16 %v1171
    %v1318 = vunpack.c.l.b16 %v1172
    %v1319 = vunpack.c.h.b16 %v1172
    %v1320 = vunpack.c.l.b16 %v1173
    %v1321 = vunpack.c.h.b16 %v1173
    %v1322 = vunpack.c.l.b16 %v1174
    %v1323 = vunpack.c.h.b16 %v1174
    %v1324 = vunpack.c.l.b16 %v1175
    %v1325 = vunpack.c.h.b16 %v1175
    %v1326 = vunpack.c.l.b16 %v1176
    %v1327 = vunpack.c.h.b16 %v1176
    %v1328 = vunpack.c.l.b16 %v1177
    %v1329 = vunpack.c.h.b16 %v1177
    %v1330 = vunpack.c.l.b16 %v1178
    %v1331 = vunpack.c.h.b16 %v1178
    %v1332 = vunpack.c.l.b16 %v1179
    %v1333 = vunpack.c.h.b16 %v1179
    %v1334 = vunpack.c.l.b16 %v1180
    %v1335 = vunpack.c.h.b16 %v1180
    %v1336 = vunpack.c.l.b16 %v1181
    %v1337 = vunpack.c.h.b16 %v1181
    %v1338 = vunpack.c.l.b16 %v1182
    %v1339 = vunpack.c.h.b16 %v1182
    %v1340 = vunpack.c.l.b16 %v1183
    %v1341 = vunpack.c.h.b16 %v1183
    %v1342 = vunpack.c.l.b16 %v1184
    %v1343 = vunpack.c.h.b16 %v1184
    %v1344 = vunpack.c.l.b16 %v1185
    %v1345 = vunpack.c.h.b16 %v1185
    %v1346 = vunpack.c.l.b16 %v1186
    %v1347 = vunpack.c.h.b16 %v1186
    %v1348 = vunpack.c.l.b16 %v1187
    %v1349 = vunpack.c.h.b16 %v1187
    %v1350 = vunpack.c.l.b16 %v1188
    %v1351 = vunpack.c.h.b16 %v1188
    %v1352 = vunpack.c.l.b16 %v1189
    %v1353 = vunpack.c.h.b16 %v1189
    %v1354 = vunpack.c.l.b16 %v1190
    %v1355 = vunpack.c.h.b16 %v1190
    %v1356 = vunpack.c.l.b16 %v1191
    %v1357 = vunpack.c.h.b16 %v1191
    %v1358 = vunpack.c.l.b16 %v1192
    %v1359 = vunpack.c.h.b16 %v1192
    %v1360 = vunpack.c.l.b16 %v1193
    %v1361 = vunpack.c.h.b16 %v1193
    %v1362 = vunpack.c.l.b16 %v1194
    %v1363 = vunpack.c.h.b16 %v1194
    %v1364 = vunpack.c.l.b16 %v1195
    %v1365 = vunpack.c.h.b16 %v1195
    %v1366 = vunpack.c.l.b16 %v1196
    %v1367 = vunpack.c.h.b16 %v1196
    %v1368 = vunpack.c.l.b16 %v1197
    %v1369 = vunpack.c.h.b16 %v1197
    %v1370 = vunpack.c.l.b16 %v1198
    %v1371 = vunpack.c.h.b16 %v1198
    %v1372 = vunpack.c.l.b16 %v1199
    %v1373 = vunpack.c.h.b16 %v1199
    %v1374 = vunpack.c.l.b16 %v1200
    %v1375 = vunpack.c.h.b16 %v1200
    %v1376 = vunpack.c.l.b16 %v1201
    %v1377 = vunpack.c.h.b16 %v1201
    %v1378 = vunpack.c.l.b16 %v1202
    %v1379 = vunpack.c.h.b16 %v1202
    %v1380 = vunpack.c.l.b16 %v1203
    %v1381 = vunpack.c.h.b16 %v1203
    %v1382 = vunpack.c.l.b16 %v1204
    %v1383 = vunpack.c.h.b16 %v1204
    %v1384 = vunpack.c.l.b16 %v1205
    %v1385 = vunpack.c.h.b16 %v1205
    %v1386 = vunpack.c.l.b16 %v1206
    %v1387 = vunpack.c.h.b16 %v1206
    %v1388 = vunpack.c.l.b16 %v1207
    %v1389 = vunpack.c.h.b16 %v1207
    %v1390 = vunpack.c.l.b16 %v1208
    %v1391 = vunpack.c.h.b16 %v1208
    %v1392 = vunpack.c.l.b16 %v1209
    %v1393 = vunpack.c.h.b16 %v1209
    %v1394 = vunpack.c.l.b16 %v1210
    %v1395 = vunpack.c.h.b16 %v1210
    %v1396 = vunpack.c.l.b16 %v1211
    %v1397 = vunpack.c.h.b16 %v1211
    %v1398 = vunpack.c.l.b16 %v1212
    %v1399 = vunpack.c.h.b16 %v1212
    %v1400 = vunpack.c.l.b16 %v1213
    %v1401 = vunpack.c.h.b16 %v1213
    %v1402 = vunpack.c.l.b16 %v1214
    %v1403 = vunpack.c.h.b16 %v1214
    %v1404 = vunpack.c.l.b16 %v1215
    %v1405 = vunpack.c.h.b16 %v1215
    %v1406 = vunpack.c.l.b16 %v1216
    %v1407 = vunpack.c.h.b16 %v1216
    %v1408 = vunpack.c.l.b16 %v1217
    %v1409 = vunpack.c.h.b16 %v1217
    %v1410 = vpack.c.b16 %v1284, %v1282
    %v1411 = vpack.c.b16 %v1285, %v1283
    %v1412 = vpack.c.b16 %v1288, %v1286
    %v1413 = vpack.c.b16 %v1289, %v1287
    %v1414 = vpack.c.b16 %v1292, %v1290
    %v1415 = vpack.c.b16 %v1293, %v1291
    %v1416 = vpack.c.b16 %v1296, %v1294
    %v1417 = vpack.c.b16 %v1297, %v1295
    %v1418 = vpack.c.b16 %v1300, %v1298
    %v1419 = vpack.c.b16 %v1301, %v1299
    %v1420 = vpack.c.b16 %v1304, %v1302
    %v1421 = vpack.c.b16 %v1305, %v1303
    %v1422 = vpack.c.b16 %v1308, %v1306
    %v1423 = vpack.c.b16 %v1309, %v1307
    %v1424 = vpack.c.b16 %v1312, %v1310
    %v1425 = vpack.c.b16 %v1313, %v1311
    %v1426 = vpack.c.b16 %v1316, %v1314
    %v1427 = vpack.c.b16 %v1317, %v1315
    %v1428 = vpack.c.b16 %v1320, %v1318
    %v1429 = vpack.c.b16 %v1321, %v1319
    %v1430 = vpack.c.b16 %v1324, %v1322
    %v1431 = vpack.c.b16 %v1325, %v1323
    %v1432 = vpack.c.b16 %v1328, %v1326
    %v1433 = vpack.c.b16 %v1329, %v1327
    %v1434 = vpack.c.b16 %v1332, %v1330
    %v1435 = vpack.c.b16 %v1333, %v1331
    %v1436 = vpack.c.b16 %v1336, %v1334
    %v1437 = vpack.c.b16 %v1337, %v1335
    %v1438 = vpack.c.b16 %v1340, %v1338
    %v1439 = vpack.c.b16 %v1341, %v1339
    %v1440 = vpack.c.b16 %v1344, %v1342
    %v1441 = vpack.c.b16 %v1345, %v1343
    %v1442 = vpack.c.b16 %v1348, %v1346
    %v1443 = vpack.c.b16 %v1349, %v1347
    %v1444 = vpack.c.b16 %v1352, %v1350
    %v1445 = vpack.c.b16 %v1353, %v1351
    %v1446 = vpack.c.b16 %v1356, %v1354
    %v1447 = vpack.c.b16 %v1357, %v1355
    %v1448 = vpack.c.b16 %v1360, %v1358
    %v1449 = vpack.c.b16 %v1361, %v1359
    %v1450 = vpack.c.b16 %v1364, %v1362
    %v1451 = vpack.c.b16 %v1365, %v1363
    %v1452 = vpack.c.b16 %v1368, %v1366
    %v1453 = vpack.c.b16 %v1369, %v1367
    %v1454 = vpack.c.b16 %v1372, %v1370
    %v1455 = vpack.c.b16 %v1373, %v1371
    %v1456 = vpack.c.b16 %v1376, %v1374
    %v1457 = vpack.c.b16 %v1377, %v1375
    %v1458 = vpack.c.b16 %v1380, %v1378
    %v1459 = vpack.c.b16 %v1381, %v1379
    %v1460 = vpack.c.b16 %v1384, %v1382
    %v1461 = vpack.c.b16 %v1385, %v1383
    %v1462 = vpack.c.b16 %v1388, %v1386
    %v1463 = vpack.c.b16 %v1389, %v1387
    %v1464 = vpack.c.b16 %v1392, %v1390
    %v1465 = vpack.c.b16 %v1393, %v1391
    %v1466 = vpack.c.b16 %v1396, %v1394
    %v1467 = vpack.c.b16 %v1397, %v1395
    %v1468 = vpack.c.b16 %v1400, %v1398
    %v1469 = vpack.c.b16 %v1401, %v1399
    %v1470 = vpack.c.b16 %v1404, %v1402
    %v1471 = vpack.c.b16 %v1405, %v1403
    %v1472 = vpack.c.b16 %v1408, %v1406
    %v1473 = vpack.c.b16 %v1409, %v1407
    %1538 = vmatprep.subr.bf16.mxu0 %v1425
    %1539 = vmatpush1.bf16.msra.mxu0 %v1424
    %1540 = vmatprep.subr.bf16.mxu0 %v1423
    %1541 = vmatpush1.bf16.msra.mxu0 %v1422
    %1542 = vmatprep.subr.bf16.mxu0 %v1421
    %1543 = vmatpush1.bf16.msra.mxu0 %v1420
    %1544 = vmatprep.subr.bf16.mxu0 %v1419
    %1545 = vmatpush1.bf16.msra.mxu0 %v1418
    %1546 = vmatprep.subr.bf16.mxu0 %v1417
    %1547 = vmatpush1.bf16.msra.mxu0 %v1416
    %1548 = vmatprep.subr.bf16.mxu0 %v1415
    %1549 = vmatpush1.bf16.msra.mxu0 %v1414
    %1550 = vmatprep.subr.bf16.mxu0 %v1413
    %1551 = vmatpush1.bf16.msra.mxu0 %v1412
    %1552 = vmatprep.subr.bf16.mxu0 %v1411
    %1553 = vmatpush1.bf16.msra.mxu0 %v1410
    %1554 = vmatprep.subr.bf16.mxu0 %v1441
    %1555 = vmatpush2.bf16.msra.mxu0 %v1440
    %1556 = vmatprep.subr.bf16.mxu0 %v1439
    %1557 = vmatpush2.bf16.msra.mxu0 %v1438
    %1558 = vmatprep.subr.bf16.mxu0 %v1437
    %1559 = vmatpush2.bf16.msra.mxu0 %v1436
    %1560 = vmatprep.subr.bf16.mxu0 %v1435
    %1561 = vmatpush2.bf16.msra.mxu0 %v1434
    %1562 = vmatprep.subr.bf16.mxu0 %v1433
    %1563 = vmatpush2.bf16.msra.mxu0 %v1432
    %1564 = vmatprep.subr.bf16.mxu0 %v1431
    %1565 = vmatpush2.bf16.msra.mxu0 %v1430
    %1566 = vmatprep.subr.bf16.mxu0 %v1429
    %1567 = vmatpush2.bf16.msra.mxu0 %v1428
    %1568 = vmatprep.subr.bf16.mxu0 %v1427
    %1569 = vmatpush2.bf16.msra.mxu0 %v1426
    %1570 = vmatprep.mubr.bf16.mxu0 %v221
    %1571 = vmatmul.mubr.bf16.gmra.mxu0 %v220
    %v1572 = vpop.f32.mrf.mxu0
    %v1573 = vadd.f32 0.0, %v1572
    %v1574 = vpop.f32.mrf.mxu0
    %v1575 = vadd.f32 0.0, %v1574
    %v1576 = vpop.f32.mrf.mxu0
    %v1577 = vadd.f32 0.0, %v1576
    %v1578 = vpop.f32.mrf.mxu0
    %v1579 = vadd.f32 0.0, %v1578
    %1580 = vmatprep.mubr.bf16.mxu0 %v225
    %1581 = vmatmul.mubr.bf16.gmra.mxu0 %v224
    %v1582 = vpop.f32.mrf.mxu0
    %v1583 = vadd.f32 0.0, %v1582
    %v1584 = vpop.f32.mrf.mxu0
    %v1585 = vadd.f32 0.0, %v1584
    %v1586 = vpop.f32.mrf.mxu0
    %v1587 = vadd.f32 0.0, %v1586
    %v1588 = vpop.f32.mrf.mxu0
    %v1589 = vadd.f32 0.0, %v1588
    %1590 = vdwg.mxu0
    %1591 = vmatprep.subr.bf16.mxu0 %v1457
    %1592 = vmatpush1.bf16.msra.mxu0 %v1456
    %1593 = vmatprep.subr.bf16.mxu0 %v1455
    %1594 = vmatpush1.bf16.msra.mxu0 %v1454
    %1595 = vmatprep.subr.bf16.mxu0 %v1453
    %1596 = vmatpush1.bf16.msra.mxu0 %v1452
    %1597 = vmatprep.subr.bf16.mxu0 %v1451
    %1598 = vmatpush1.bf16.msra.mxu0 %v1450
    %1599 = vmatprep.subr.bf16.mxu0 %v1449
    %1600 = vmatpush1.bf16.msra.mxu0 %v1448
    %1601 = vmatprep.subr.bf16.mxu0 %v1447
    %1602 = vmatpush1.bf16.msra.mxu0 %v1446
    %1603 = vmatprep.subr.bf16.mxu0 %v1445
    %1604 = vmatpush1.bf16.msra.mxu0 %v1444
    %1605 = vmatprep.subr.bf16.mxu0 %v1443
    %1606 = vmatpush1.bf16.msra.mxu0 %v1442
    %1607 = vmatprep.subr.bf16.mxu0 %v1473
    %1608 = vmatpush2.bf16.msra.mxu0 %v1472
    %1609 = vmatprep.subr.bf16.mxu0 %v1471
    %1610 = vmatpush2.bf16.msra.mxu0 %v1470
    %1611 = vmatprep.subr.bf16.mxu0 %v1469
    %1612 = vmatpush2.bf16.msra.mxu0 %v1468
    %1613 = vmatprep.subr.bf16.mxu0 %v1467
    %1614 = vmatpush2.bf16.msra.mxu0 %v1466
    %1615 = vmatprep.subr.bf16.mxu0 %v1465
    %1616 = vmatpush2.bf16.msra.mxu0 %v1464
    %1617 = vmatprep.subr.bf16.mxu0 %v1463
    %1618 = vmatpush2.bf16.msra.mxu0 %v1462
    %1619 = vmatprep.subr.bf16.mxu0 %v1461
    %1620 = vmatpush2.bf16.msra.mxu0 %v1460
    %1621 = vmatprep.subr.bf16.mxu0 %v1459
    %1622 = vmatpush2.bf16.msra.mxu0 %v1458
    %1623 = vmatprep.mubr.bf16.mxu0 %v223
    %1624 = vmatmul.mubr.bf16.gmra.mxu0 %v222
    %v1625 = vpop.f32.mrf.mxu0
    %v1626 = vadd.f32 %v1573, %v1625
    %v1627 = vpop.f32.mrf.mxu0
    %v1628 = vadd.f32 %v1575, %v1627
    %v1629 = vpop.f32.mrf.mxu0
    %v1630 = vadd.f32 %v1577, %v1629
    %v1631 = vpop.f32.mrf.mxu0
    %v1632 = vadd.f32 %v1579, %v1631
    %1633 = vmatprep.mubr.bf16.mxu0 %v227
    %1634 = vmatmul.mubr.bf16.gmra.mxu0 %v226
    %v1635 = vpop.f32.mrf.mxu0
    %v1636 = vadd.f32 %v1583, %v1635
    %v1637 = vpop.f32.mrf.mxu0
    %v1638 = vadd.f32 %v1585, %v1637
    %v1639 = vpop.f32.mrf.mxu0
    %v1640 = vadd.f32 %v1587, %v1639
    %v1641 = vpop.f32.mrf.mxu0
    %v1642 = vadd.f32 %v1589, %v1641
    %1643 = vdwg.mxu0
    %v1644 = vrot.slane %v644, 7
    %v1645 = vrot.slane %v646, 7
    %v1646 = vrot.slane %v648, 7
    %v1647 = vrot.slane %v650, 7
    %v1648 = vrot.slane %v654, 7
    %v1649 = vrot.slane %v656, 7
    %v1650 = vrot.slane %v658, 7
    %v1651 = vrot.slane %v660, 7
    %vm1652 = vcmp.lt.s32.totalorder %v72, 1
    %v1653 = vsel %vm1652, %v1648, %v1650
    %v1654 = vsel %vm1652, %v1649, %v1651
    %v1655 = vsel %vm1652, %v1646, %v1648
    %v1656 = vsel %vm1652, %v1647, %v1649
    %v1657 = vsel %vm1652, %v1644, %v1646
    %v1658 = vsel %vm1652, %v1645, %v1647
    %v1659 = vsel %vm1652, %v1650, %v1644
    %v1660 = vsel %vm1652, %v1651, %v1645
    %v1661 = vsel %vm124, 1, 0
    %v1662 = vsel %vm125, 1, 0
    %v1663 = vsel %vm126, 1, 0
    %v1664 = vsel %vm127, 1, 0
    %vm1665 = vcmp.eq.s32.totalorder %v1661, 1
    %vm1666 = vcmp.eq.s32.totalorder %v1662, 1
    %vm1667 = vcmp.eq.s32.totalorder %v1663, 1
    %vm1668 = vcmp.eq.s32.totalorder %v1664, 1
    %v1669 = vsel %vm1665, 0.0, %v1659
    %v1670 = vsel %vm1665, 0.0, %v1660
    %v1671 = vsel %vm1666, 0.0, %v1657
    %v1672 = vsel %vm1666, 0.0, %v1658
    %v1673 = vsel %vm1667, 0.0, %v1655
    %v1674 = vsel %vm1667, 0.0, %v1656
    %v1675 = vsel %vm1668, 0.0, %v1653
    %v1676 = vsel %vm1668, 0.0, %v1654
    %v1677 = vadd.f32 %v1669, %v1135
    %v1678 = vadd.f32 %v1670, %v1137
    %v1679 = vadd.f32 %v1671, %v1139
    %v1680 = vadd.f32 %v1672, %v1141
    %v1681 = vadd.f32 %v1673, %v1145
    %v1682 = vadd.f32 %v1674, %v1147
    %v1683 = vadd.f32 %v1675, %v1149
    %v1684 = vadd.f32 %v1676, %v1151
    %v1685 = vrot.slane %v1626, 1
    %v1686 = vrot.slane %v1628, 1
    %v1687 = vrot.slane %v1630, 1
    %v1688 = vrot.slane %v1632, 1
    %v1689 = vrot.slane %v1636, 1
    %v1690 = vrot.slane %v1638, 1
    %v1691 = vrot.slane %v1640, 1
    %v1692 = vrot.slane %v1642, 1
    %vm1693 = vcmp.lt.s32.totalorder %v72, 7
    %v1694 = vsel %vm1693, %v1689, %v1691
    %v1695 = vsel %vm1693, %v1690, %v1692
    %v1696 = vsel %vm1693, %v1687, %v1689
    %v1697 = vsel %vm1693, %v1688, %v1690
    %v1698 = vsel %vm1693, %v1685, %v1687
    %v1699 = vsel %vm1693, %v1686, %v1688
    %v1700 = vsel %vm1693, %v1691, %v1685
    %v1701 = vsel %vm1693, %v1692, %v1686
    %v1702 = vsel %vm128, 1, 0
    %v1703 = vsel %vm129, 1, 0
    %v1704 = vsel %vm130, 1, 0
    %v1705 = vsel %vm131, 1, 0
    %vm1706 = vcmp.eq.s32.totalorder %v1702, 1
    %vm1707 = vcmp.eq.s32.totalorder %v1703, 1
    %vm1708 = vcmp.eq.s32.totalorder %v1704, 1
    %vm1709 = vcmp.eq.s32.totalorder %v1705, 1
    %v1710 = vsel %vm1706, 0.0, %v1698
    %v1711 = vsel %vm1706, 0.0, %v1699
    %v1712 = vsel %vm1707, 0.0, %v1696
    %v1713 = vsel %vm1707, 0.0, %v1697
    %v1714 = vsel %vm1708, 0.0, %v1694
    %v1715 = vsel %vm1708, 0.0, %v1695
    %v1716 = vsel %vm1709, 0.0, %v1700
    %v1717 = vsel %vm1709, 0.0, %v1701
    %v1718 = vadd.f32 %v1677, %v1710
    %v1719 = vadd.f32 %v1678, %v1711
    %v1720 = vadd.f32 %v1679, %v1712
    %v1721 = vadd.f32 %v1680, %v1713
    %v1722 = vadd.f32 %v1681, %v1714
    %v1723 = vadd.f32 %v1682, %v1715
    %v1724 = vadd.f32 %v1683, %v1716
    %v1725 = vadd.f32 %v1684, %v1717
    %v1726 = vld [vmem:[%s2] sm:$0x3]
    %v1728 = vlaneseq
    %v1729 = vshrl.u32 %v1728, 7
    %v1730 = vsub.s32 0, %v1729
    %v1731 = vrot.slane %v1726, %v1730
    %v1732 = vlaneseq
    %v1733 = vshrl.u32 %v1732, 7
    %v1734 = vsub.s32 1, %v1733
    %v1735 = vrot.slane %v1726, %v1734
    %v1738 = vadd.f32 %v1718, %v1731
    %v1739 = vadd.f32 %v1719, %v1735
    %v1740 = vadd.f32 %v1720, %v1731
    %v1741 = vadd.f32 %v1721, %v1735
    %v1742 = vadd.f32 %v1722, %v1731
    %v1743 = vadd.f32 %v1723, %v1735
    %v1744 = vadd.f32 %v1724, %v1731
    %v1745 = vadd.f32 %v1725, %v1735
    %v1746 = vmul.f32 %v1738, %v1738
    %v1747 = vmul.f32 %v1739, %v1739
    %v1748 = vmul.f32 %v1740, %v1740
    %v1749 = vmul.f32 %v1741, %v1741
    %v1750 = vmul.f32 %v1742, %v1742
    %v1751 = vmul.f32 %v1743, %v1743
    %v1752 = vmul.f32 %v1744, %v1744
    %v1753 = vmul.f32 %v1745, %v1745
    %v1754 = vmul.f32 %v1738, %v1746
    %v1755 = vmul.f32 %v1739, %v1747
    %v1756 = vmul.f32 %v1740, %v1748
    %v1757 = vmul.f32 %v1741, %v1749
    %v1758 = vmul.f32 %v1742, %v1750
    %v1759 = vmul.f32 %v1743, %v1751
    %v1760 = vmul.f32 %v1744, %v1752
    %v1761 = vmul.f32 %v1745, %v1753
    %v1762 = vmul.f32 %v1754, 0.044715
    %v1763 = vmul.f32 %v1755, 0.044715
    %v1764 = vmul.f32 %v1756, 0.044715
    %v1765 = vmul.f32 %v1757, 0.044715
    %v1766 = vmul.f32 %v1758, 0.044715
    %v1767 = vmul.f32 %v1759, 0.044715
    %v1768 = vmul.f32 %v1760, 0.044715
    %v1769 = vmul.f32 %v1761, 0.044715
    %v1770 = vadd.f32 %v1738, %v1762
    %v1771 = vadd.f32 %v1739, %v1763
    %v1772 = vadd.f32 %v1740, %v1764
    %v1773 = vadd.f32 %v1741, %v1765
    %v1774 = vadd.f32 %v1742, %v1766
    %v1775 = vadd.f32 %v1743, %v1767
    %v1776 = vadd.f32 %v1744, %v1768
    %v1777 = vadd.f32 %v1745, %v1769
    %v1778 = vmul.f32 %v1770, 0.7978846
    %v1779 = vmul.f32 %v1771, 0.7978846
    %v1780 = vmul.f32 %v1772, 0.7978846
    %v1781 = vmul.f32 %v1773, 0.7978846
    %v1782 = vmul.f32 %v1774, 0.7978846
    %v1783 = vmul.f32 %v1775, 0.7978846
    %v1784 = vmul.f32 %v1776, 0.7978846
    %v1785 = vmul.f32 %v1777, 0.7978846
    %v1786 = vtanh.pop %v1778
    %v1787 = vtanh.pop %v1779
    %v1788 = vtanh.pop %v1780
    %v1789 = vtanh.pop %v1781
    %v1790 = vtanh.pop %v1782
    %v1791 = vtanh.pop %v1783
    %v1792 = vtanh.pop %v1784
    %v1793 = vtanh.pop %v1785
    %v1794 = vadd.f32 %v1786, 1.0
    %v1795 = vadd.f32 %v1787, 1.0
    %v1796 = vadd.f32 %v1788, 1.0
    %v1797 = vadd.f32 %v1789, 1.0
    %v1798 = vadd.f32 %v1790, 1.0
    %v1799 = vadd.f32 %v1791, 1.0
    %v1800 = vadd.f32 %v1792, 1.0
    %v1801 = vadd.f32 %v1793, 1.0
    %v1802 = vmul.f32 %v1794, 0.5
    %v1803 = vmul.f32 %v1795, 0.5
    %v1804 = vmul.f32 %v1796, 0.5
    %v1805 = vmul.f32 %v1797, 0.5
    %v1806 = vmul.f32 %v1798, 0.5
    %v1807 = vmul.f32 %v1799, 0.5
    %v1808 = vmul.f32 %v1800, 0.5
    %v1809 = vmul.f32 %v1801, 0.5
    %v1810 = vmul.f32 %v1738, %v1802
    %v1811 = vmul.f32 %v1739, %v1803
    %v1812 = vmul.f32 %v1740, %v1804
    %v1813 = vmul.f32 %v1741, %v1805
    %v1814 = vmul.f32 %v1742, %v1806
    %v1815 = vmul.f32 %v1743, %v1807
    %v1816 = vmul.f32 %v1744, %v1808
    %v1817 = vmul.f32 %v1745, %v1809
    %v1818 = vpack.c.bf16 %v1812, %v1810
    %v1819 = vpack.c.bf16 %v1813, %v1811
    %v1820 = vpack.c.bf16 %v1816, %v1814
    %v1821 = vpack.c.bf16 %v1817, %v1815
    %v1822 = vld [vmem:[#allocation7] sm:$0xff]
    %v1823 = vld [vmem:[#allocation7 + $0x8] sm:$0xf]
    %v1824 = vld [vmem:[#allocation7 + $0xc] sm:$0xff]
    %v1825 = vld [vmem:[#allocation7 + $0x14] sm:$0xf]
    %v1826 = vld [vmem:[#allocation7 + $0x18] sm:$0xff]
    %v1827 = vld [vmem:[#allocation7 + $0x20] sm:$0xf]
    %v1828 = vld [vmem:[#allocation7 + $0x24] sm:$0xff]
    %v1829 = vld [vmem:[#allocation7 + $0x2c] sm:$0xf]
    %v1830 = vld [vmem:[#allocation7 + $0x30] sm:$0xff]
    %v1831 = vld [vmem:[#allocation7 + $0x38] sm:$0xf]
    %v1832 = vld [vmem:[#allocation7 + $0x3c] sm:$0xff]
    %v1833 = vld [vmem:[#allocation7 + $0x44] sm:$0xf]
    %v1834 = vld [vmem:[#allocation7 + $0x48] sm:$0xff]
    %v1835 = vld [vmem:[#allocation7 + $0x50] sm:$0xf]
    %v1836 = vld [vmem:[#allocation7 + $0x54] sm:$0xff]
    %v1837 = vld [vmem:[#allocation7 + $0x5c] sm:$0xf]
    %v1838 = vld [vmem:[#allocation7 + $0x60] sm:$0xff]
    %v1839 = vld [vmem:[#allocation7 + $0x68] sm:$0xf]
    %v1840 = vld [vmem:[#allocation7 + $0x6c] sm:$0xff]
    %v1841 = vld [vmem:[#allocation7 + $0x74] sm:$0xf]
    %v1842 = vld [vmem:[#allocation7 + $0x78] sm:$0xff]
    %v1843 = vld [vmem:[#allocation7 + $0x80] sm:$0xf]
    %v1844 = vld [vmem:[#allocation7 + $0x84] sm:$0xff]
    %v1845 = vld [vmem:[#allocation7 + $0x8c] sm:$0xf]
    %v1846 = vld [vmem:[#allocation7 + $0x90] sm:$0xff]
    %v1847 = vld [vmem:[#allocation7 + $0x98] sm:$0xf]
    %v1848 = vld [vmem:[#allocation7 + $0x9c] sm:$0xff]
    %v1849 = vld [vmem:[#allocation7 + $0xa4] sm:$0xf]
    %v1850 = vld [vmem:[#allocation7 + $0xa8] sm:$0xff]
    %v1851 = vld [vmem:[#allocation7 + $0xb0] sm:$0xf]
    %v1852 = vld [vmem:[#allocation7 + $0xb4] sm:$0xff]
    %v1853 = vld [vmem:[#allocation7 + $0xbc] sm:$0xf]
    %v1854 = vld [vmem:[#allocation7 + $0xc0] sm:$0xff]
    %v1855 = vld [vmem:[#allocation7 + $0xc8] sm:$0xf]
    %v1856 = vld [vmem:[#allocation7 + $0xcc] sm:$0xff]
    %v1857 = vld [vmem:[#allocation7 + $0xd4] sm:$0xf]
    %v1858 = vld [vmem:[#allocation7 + $0xd8] sm:$0xff]
    %v1859 = vld [vmem:[#allocation7 + $0xe0] sm:$0xf]
    %v1860 = vld [vmem:[#allocation7 + $0xe4] sm:$0xff]
    %v1861 = vld [vmem:[#allocation7 + $0xec] sm:$0xf]
    %v1862 = vld [vmem:[#allocation7 + $0xf0] sm:$0xff]
    %v1863 = vld [vmem:[#allocation7 + $0xf8] sm:$0xf]
    %v1864 = vld [vmem:[#allocation7 + $0xfc] sm:$0xff]
    %v1865 = vld [vmem:[#allocation7 + $0x104] sm:$0xf]
    %v1866 = vld [vmem:[#allocation7 + $0x108] sm:$0xff]
    %v1867 = vld [vmem:[#allocation7 + $0x110] sm:$0xf]
    %v1868 = vld [vmem:[#allocation7 + $0x114] sm:$0xff]
    %v1869 = vld [vmem:[#allocation7 + $0x11c] sm:$0xf]
    %v1870 = vld [vmem:[#allocation7 + $0x120] sm:$0xff]
    %v1871 = vld [vmem:[#allocation7 + $0x128] sm:$0xf]
    %v1872 = vld [vmem:[#allocation7 + $0x12c] sm:$0xff]
    %v1873 = vld [vmem:[#allocation7 + $0x134] sm:$0xf]
    %v1874 = vld [vmem:[#allocation7 + $0x138] sm:$0xff]
    %v1875 = vld [vmem:[#allocation7 + $0x140] sm:$0xf]
    %v1876 = vld [vmem:[#allocation7 + $0x144] sm:$0xff]
    %v1877 = vld [vmem:[#allocation7 + $0x14c] sm:$0xf]
    %v1878 = vld [vmem:[#allocation7 + $0x150] sm:$0xff]
    %v1879 = vld [vmem:[#allocation7 + $0x158] sm:$0xf]
    %v1880 = vld [vmem:[#allocation7 + $0x15c] sm:$0xff]
    %v1881 = vld [vmem:[#allocation7 + $0x164] sm:$0xf]
    %v1882 = vld [vmem:[#allocation7 + $0x168] sm:$0xff]
    %v1883 = vld [vmem:[#allocation7 + $0x170] sm:$0xf]
    %v1884 = vld [vmem:[#allocation7 + $0x174] sm:$0xff]
    %v1885 = vld [vmem:[#allocation7 + $0x17c] sm:$0xf]
    %v1950 = vunpack.c.l.b16 %v1822
    %v1951 = vunpack.c.h.b16 %v1822
    %v1952 = vunpack.c.l.b16 %v1823
    %v1953 = vunpack.c.l.b16 %v1824
    %v1954 = vunpack.c.h.b16 %v1824
    %v1955 = vunpack.c.l.b16 %v1825
    %v1956 = vunpack.c.l.b16 %v1826
    %v1957 = vunpack.c.h.b16 %v1826
    %v1958 = vunpack.c.l.b16 %v1827
    %v1959 = vunpack.c.l.b16 %v1828
    %v1960 = vunpack.c.h.b16 %v1828
    %v1961 = vunpack.c.l.b16 %v1829
    %v1962 = vunpack.c.l.b16 %v1830
    %v1963 = vunpack.c.h.b16 %v1830
    %v1964 = vunpack.c.l.b16 %v1831
    %v1965 = vunpack.c.l.b16 %v1832
    %v1966 = vunpack.c.h.b16 %v1832
    %v1967 = vunpack.c.l.b16 %v1833
    %v1968 = vunpack.c.l.b16 %v1834
    %v1969 = vunpack.c.h.b16 %v1834
    %v1970 = vunpack.c.l.b16 %v1835
    %v1971 = vunpack.c.l.b16 %v1836
    %v1972 = vunpack.c.h.b16 %v1836
    %v1973 = vunpack.c.l.b16 %v1837
    %v1974 = vunpack.c.l.b16 %v1838
    %v1975 = vunpack.c.h.b16 %v1838
    %v1976 = vunpack.c.l.b16 %v1839
    %v1977 = vunpack.c.l.b16 %v1840
    %v1978 = vunpack.c.h.b16 %v1840
    %v1979 = vunpack.c.l.b16 %v1841
    %v1980 = vunpack.c.l.b16 %v1842
    %v1981 = vunpack.c.h.b16 %v1842
    %v1982 = vunpack.c.l.b16 %v1843
    %v1983 = vunpack.c.l.b16 %v1844
    %v1984 = vunpack.c.h.b16 %v1844
    %v1985 = vunpack.c.l.b16 %v1845
    %v1986 = vunpack.c.l.b16 %v1846
    %v1987 = vunpack.c.h.b16 %v1846
    %v1988 = vunpack.c.l.b16 %v1847
    %v1989 = vunpack.c.l.b16 %v1848
    %v1990 = vunpack.c.h.b16 %v1848
    %v1991 = vunpack.c.l.b16 %v1849
    %v1992 = vunpack.c.l.b16 %v1850
    %v1993 = vunpack.c.h.b16 %v1850
    %v1994 = vunpack.c.l.b16 %v1851
    %v1995 = vunpack.c.l.b16 %v1852
    %v1996 = vunpack.c.h.b16 %v1852
    %v1997 = vunpack.c.l.b16 %v1853
    %v1998 = vunpack.c.l.b16 %v1854
    %v1999 = vunpack.c.h.b16 %v1854
    %v2000 = vunpack.c.l.b16 %v1855
    %v2001 = vunpack.c.l.b16 %v1856
    %v2002 = vunpack.c.h.b16 %v1856
    %v2003 = vunpack.c.l.b16 %v1857
    %v2004 = vunpack.c.l.b16 %v1858
    %v2005 = vunpack.c.h.b16 %v1858
    %v2006 = vunpack.c.l.b16 %v1859
    %v2007 = vunpack.c.l.b16 %v1860
    %v2008 = vunpack.c.h.b16 %v1860
    %v2009 = vunpack.c.l.b16 %v1861
    %v2010 = vunpack.c.l.b16 %v1862
    %v2011 = vunpack.c.h.b16 %v1862
    %v2012 = vunpack.c.l.b16 %v1863
    %v2013 = vunpack.c.l.b16 %v1864
    %v2014 = vunpack.c.h.b16 %v1864
    %v2015 = vunpack.c.l.b16 %v1865
    %v2016 = vunpack.c.l.b16 %v1866
    %v2017 = vunpack.c.h.b16 %v1866
    %v2018 = vunpack.c.l.b16 %v1867
    %v2019 = vunpack.c.l.b16 %v1868
    %v2020 = vunpack.c.h.b16 %v1868
    %v2021 = vunpack.c.l.b16 %v1869
    %v2022 = vunpack.c.l.b16 %v1870
    %v2023 = vunpack.c.h.b16 %v1870
    %v2024 = vunpack.c.l.b16 %v1871
    %v2025 = vunpack.c.l.b16 %v1872
    %v2026 = vunpack.c.h.b16 %v1872
    %v2027 = vunpack.c.l.b16 %v1873
    %v2028 = vunpack.c.l.b16 %v1874
    %v2029 = vunpack.c.h.b16 %v1874
    %v2030 = vunpack.c.l.b16 %v1875
    %v2031 = vunpack.c.l.b16 %v1876
    %v2032 = vunpack.c.h.b16 %v1876
    %v2033 = vunpack.c.l.b16 %v1877
    %v2034 = vunpack.c.l.b16 %v1878
    %v2035 = vunpack.c.h.b16 %v1878
    %v2036 = vunpack.c.l.b16 %v1879
    %v2037 = vunpack.c.l.b16 %v1880
    %v2038 = vunpack.c.h.b16 %v1880
    %v2039 = vunpack.c.l.b16 %v1881
    %v2040 = vunpack.c.l.b16 %v1882
    %v2041 = vunpack.c.h.b16 %v1882
    %v2042 = vunpack.c.l.b16 %v1883
    %v2043 = vunpack.c.l.b16 %v1884
    %v2044 = vunpack.c.h.b16 %v1884
    %v2045 = vunpack.c.l.b16 %v1885
    %v2046 = vpack.c.b16 %v1953, %v1950
    %v2047 = vpack.c.b16 %v1954, %v1951
    %v2048 = vpack.c.b16 %v1955, %v1952
    %v2049 = vpack.c.b16 %v1959, %v1956
    %v2050 = vpack.c.b16 %v1960, %v1957
    %v2051 = vpack.c.b16 %v1961, %v1958
    %v2052 = vpack.c.b16 %v1965, %v1962
    %v2053 = vpack.c.b16 %v1966, %v1963
    %v2054 = vpack.c.b16 %v1967, %v1964
    %v2055 = vpack.c.b16 %v1971, %v1968
    %v2056 = vpack.c.b16 %v1972, %v1969
    %v2057 = vpack.c.b16 %v1973, %v1970
    %v2058 = vpack.c.b16 %v1977, %v1974
    %v2059 = vpack.c.b16 %v1978, %v1975
    %v2060 = vpack.c.b16 %v1979, %v1976
    %v2061 = vpack.c.b16 %v1983, %v1980
    %v2062 = vpack.c.b16 %v1984, %v1981
    %v2063 = vpack.c.b16 %v1985, %v1982
    %v2064 = vpack.c.b16 %v1989, %v1986
    %v2065 = vpack.c.b16 %v1990, %v1987
    %v2066 = vpack.c.b16 %v1991, %v1988
    %v2067 = vpack.c.b16 %v1995, %v1992
    %v2068 = vpack.c.b16 %v1996, %v1993
    %v2069 = vpack.c.b16 %v1997, %v1994
    %v2070 = vpack.c.b16 %v2001, %v1998
    %v2071 = vpack.c.b16 %v2002, %v1999
    %v2072 = vpack.c.b16 %v2003, %v2000
    %v2073 = vpack.c.b16 %v2007, %v2004
    %v2074 = vpack.c.b16 %v2008, %v2005
    %v2075 = vpack.c.b16 %v2009, %v2006
    %v2076 = vpack.c.b16 %v2013, %v2010
    %v2077 = vpack.c.b16 %v2014, %v2011
    %v2078 = vpack.c.b16 %v2015, %v2012
    %v2079 = vpack.c.b16 %v2019, %v2016
    %v2080 = vpack.c.b16 %v2020, %v2017
    %v2081 = vpack.c.b16 %v2021, %v2018
    %v2082 = vpack.c.b16 %v2025, %v2022
    %v2083 = vpack.c.b16 %v2026, %v2023
    %v2084 = vpack.c.b16 %v2027, %v2024
    %v2085 = vpack.c.b16 %v2031, %v2028
    %v2086 = vpack.c.b16 %v2032, %v2029
    %v2087 = vpack.c.b16 %v2033, %v2030
    %v2088 = vpack.c.b16 %v2037, %v2034
    %v2089 = vpack.c.b16 %v2038, %v2035
    %v2090 = vpack.c.b16 %v2039, %v2036
    %v2091 = vpack.c.b16 %v2043, %v2040
    %v2092 = vpack.c.b16 %v2044, %v2041
    %v2093 = vpack.c.b16 %v2045, %v2042
    %2142 = vmatprep.subr.bf16.mxu0 %v2068
    %2143 = vmatpush1.bf16.msra.mxu0 %v2067
    %2144 = vmatprep.subr.bf16.mxu0 %v2065
    %2145 = vmatpush1.bf16.msra.mxu0 %v2064
    %2146 = vmatprep.subr.bf16.mxu0 %v2062
    %2147 = vmatpush1.bf16.msra.mxu0 %v2061
    %2148 = vmatprep.subr.bf16.mxu0 %v2059
    %2149 = vmatpush1.bf16.msra.mxu0 %v2058
    %2150 = vmatprep.subr.bf16.mxu0 %v2056
    %2151 = vmatpush1.bf16.msra.mxu0 %v2055
    %2152 = vmatprep.subr.bf16.mxu0 %v2053
    %2153 = vmatpush1.bf16.msra.mxu0 %v2052
    %2154 = vmatprep.subr.bf16.mxu0 %v2050
    %2155 = vmatpush1.bf16.msra.mxu0 %v2049
    %2156 = vmatprep.subr.bf16.mxu0 %v2047
    %2157 = vmatpush1.bf16.msra.mxu0 %v2046
    %2158 = vmatprep.subr.bf16.mxu0 %v2092
    %2159 = vmatpush2.bf16.msra.mxu0 %v2091
    %2160 = vmatprep.subr.bf16.mxu0 %v2089
    %2161 = vmatpush2.bf16.msra.mxu0 %v2088
    %2162 = vmatprep.subr.bf16.mxu0 %v2086
    %2163 = vmatpush2.bf16.msra.mxu0 %v2085
    %2164 = vmatprep.subr.bf16.mxu0 %v2083
    %2165 = vmatpush2.bf16.msra.mxu0 %v2082
    %2166 = vmatprep.subr.bf16.mxu0 %v2080
    %2167 = vmatpush2.bf16.msra.mxu0 %v2079
    %2168 = vmatprep.subr.bf16.mxu0 %v2077
    %2169 = vmatpush2.bf16.msra.mxu0 %v2076
    %2170 = vmatprep.subr.bf16.mxu0 %v2074
    %2171 = vmatpush2.bf16.msra.mxu0 %v2073
    %2172 = vmatprep.subr.bf16.mxu0 %v2071
    %2173 = vmatpush2.bf16.msra.mxu0 %v2070
    %2174 = vmatprep.mubr.bf16.mxu0 %v1819
    %2175 = vmatmul.mubr.bf16.gmra.mxu0 %v1818
    %v2176 = vpop.f32.mrf.mxu0
    %v2177 = vadd.f32 0.0, %v2176
    %v2178 = vpop.f32.mrf.mxu0
    %v2179 = vadd.f32 0.0, %v2178
    %v2180 = vpop.f32.mrf.mxu0
    %v2181 = vadd.f32 0.0, %v2180
    %v2182 = vpop.f32.mrf.mxu0
    %v2183 = vadd.f32 0.0, %v2182
    %2184 = vmatprep.mubr.bf16.mxu0 %v1821
    %2185 = vmatmul.mubr.bf16.gmra.mxu0 %v1820
    %v2186 = vpop.f32.mrf.mxu0
    %v2187 = vadd.f32 0.0, %v2186
    %v2188 = vpop.f32.mrf.mxu0
    %v2189 = vadd.f32 0.0, %v2188
    %v2190 = vpop.f32.mrf.mxu0
    %v2191 = vadd.f32 0.0, %v2190
    %v2192 = vpop.f32.mrf.mxu0
    %v2193 = vadd.f32 0.0, %v2192
    %2194 = vdwg.mxu0
    %2195 = vmatprep.subr.bf16.mxu0 0
    %2196 = vmatpush1.bf16.msra.mxu0 %v2069
    %2197 = vmatprep.subr.bf16.mxu0 0
    %2198 = vmatpush1.bf16.msra.mxu0 %v2066
    %2199 = vmatprep.subr.bf16.mxu0 0
    %2200 = vmatpush1.bf16.msra.mxu0 %v2063
    %2201 = vmatprep.subr.bf16.mxu0 0
    %2202 = vmatpush1.bf16.msra.mxu0 %v2060
    %2203 = vmatprep.subr.bf16.mxu0 0
    %2204 = vmatpush1.bf16.msra.mxu0 %v2057
    %2205 = vmatprep.subr.bf16.mxu0 0
    %2206 = vmatpush1.bf16.msra.mxu0 %v2054
    %2207 = vmatprep.subr.bf16.mxu0 0
    %2208 = vmatpush1.bf16.msra.mxu0 %v2051
    %2209 = vmatprep.subr.bf16.mxu0 0
    %2210 = vmatpush1.bf16.msra.mxu0 %v2048
    %2211 = vmatprep.subr.bf16.mxu0 0
    %2212 = vmatpush2.bf16.msra.mxu0 %v2093
    %2213 = vmatprep.subr.bf16.mxu0 0
    %2214 = vmatpush2.bf16.msra.mxu0 %v2090
    %2215 = vmatprep.subr.bf16.mxu0 0
    %2216 = vmatpush2.bf16.msra.mxu0 %v2087
    %2217 = vmatprep.subr.bf16.mxu0 0
    %2218 = vmatpush2.bf16.msra.mxu0 %v2084
    %2219 = vmatprep.subr.bf16.mxu0 0
    %2220 = vmatpush2.bf16.msra.mxu0 %v2081
    %2221 = vmatprep.subr.bf16.mxu0 0
    %2222 = vmatpush2.bf16.msra.mxu0 %v2078
    %2223 = vmatprep.subr.bf16.mxu0 0
    %2224 = vmatpush2.bf16.msra.mxu0 %v2075
    %2225 = vmatprep.subr.bf16.mxu0 0
    %2226 = vmatpush2.bf16.msra.mxu0 %v2072
    %2227 = vmatprep.mubr.bf16.mxu0 %v1819
    %2228 = vmatmul.mubr.bf16.gmra.mxu0 %v1818
    %v2229 = vpop.f32.mrf.mxu0
    %v2230 = vadd.f32 0.0, %v2229
    %v2231 = vpop.f32.mrf.mxu0
    %v2232 = vpop.f32.mrf.mxu0
    %v2233 = vadd.f32 0.0, %v2232
    %v2234 = vpop.f32.mrf.mxu0
    %2235 = vmatprep.mubr.bf16.mxu0 %v1821
    %2236 = vmatmul.mubr.bf16.gmra.mxu0 %v1820
    %v2237 = vpop.f32.mrf.mxu0
    %v2238 = vadd.f32 0.0, %v2237
    %v2239 = vpop.f32.mrf.mxu0
    %v2240 = vpop.f32.mrf.mxu0
    %v2241 = vadd.f32 0.0, %v2240
    %v2242 = vpop.f32.mrf.mxu0
    %2243 = vdwg.mxu0
    %v2244 = vrot.slane %v2177, 7
    %v2245 = vrot.slane %v2181, 7
    %v2246 = vrot.slane %v2187, 7
    %v2247 = vrot.slane %v2191, 7
    %v2248 = vsel %vm1652, %v2246, %v2247
    %v2249 = vsel %vm1652, %v2245, %v2246
    %v2250 = vsel %vm1652, %v2244, %v2245
    %v2251 = vsel %vm1652, %v2247, %v2244
    %v2252 = vsel %vm1665, 0.0, %v2251
    %v2253 = vsel %vm1666, 0.0, %v2250
    %v2254 = vsel %vm1667, 0.0, %v2249
    %v2255 = vsel %vm1668, 0.0, %v2248
    %v2256 = vadd.f32 %v2252, %v2179
    %v2257 = vadd.f32 %v2253, %v2183
    %v2258 = vadd.f32 %v2254, %v2189
    %v2259 = vadd.f32 %v2255, %v2193
    %v2260 = vrot.slane %v2230, 1
    %v2261 = vrot.slane %v2233, 1
    %v2262 = vrot.slane %v2238, 1
    %v2263 = vrot.slane %v2241, 1
    %v2264 = vsel %vm1693, %v2262, %v2263
    %v2265 = vsel %vm1693, %v2261, %v2262
    %v2266 = vsel %vm1693, %v2260, %v2261
    %v2267 = vsel %vm1693, %v2263, %v2260
    %v2268 = vsel %vm1706, 0.0, %v2266
    %v2269 = vsel %vm1707, 0.0, %v2265
    %v2270 = vsel %vm1708, 0.0, %v2264
    %v2271 = vsel %vm1709, 0.0, %v2267
    %v2272 = vadd.f32 %v2256, %v2268
    %v2273 = vadd.f32 %v2257, %v2269
    %v2274 = vadd.f32 %v2258, %v2270
    %v2275 = vadd.f32 %v2259, %v2271
    %v2276 = vld [vmem:[%s4] sm:$0x1]
    %v2278 = vlaneseq
    %v2279 = vshrl.u32 %v2278, 7
    %v2280 = vsub.s32 0, %v2279
    %v2281 = vrot.slane %v2276, %v2280
    %v2283 = vadd.f32 %v2272, %v2281
    %v2284 = vadd.f32 %v2273, %v2281
    %v2285 = vadd.f32 %v2274, %v2281
    %v2286 = vadd.f32 %v2275, %v2281
    %v2287 = vmul.f32 %v2283, %v2283
    %v2288 = vmul.f32 %v2284, %v2284
    %v2289 = vmul.f32 %v2285, %v2285
    %v2290 = vmul.f32 %v2286, %v2286
    %v2291 = vmul.f32 %v2283, %v2287
    %v2292 = vmul.f32 %v2284, %v2288
    %v2293 = vmul.f32 %v2285, %v2289
    %v2294 = vmul.f32 %v2286, %v2290
    %v2295 = vmul.f32 %v2291, 0.044715
    %v2296 = vmul.f32 %v2292, 0.044715
    %v2297 = vmul.f32 %v2293, 0.044715
    %v2298 = vmul.f32 %v2294, 0.044715
    %v2299 = vadd.f32 %v2283, %v2295
    %v2300 = vadd.f32 %v2284, %v2296
    %v2301 = vadd.f32 %v2285, %v2297
    %v2302 = vadd.f32 %v2286, %v2298
    %v2303 = vmul.f32 %v2299, 0.7978846
    %v2304 = vmul.f32 %v2300, 0.7978846
    %v2305 = vmul.f32 %v2301, 0.7978846
    %v2306 = vmul.f32 %v2302, 0.7978846
    %v2307 = vtanh.pop %v2303
    %v2308 = vtanh.pop %v2304
    %v2309 = vtanh.pop %v2305
    %v2310 = vtanh.pop %v2306
    %v2311 = vadd.f32 %v2307, 1.0
    %v2312 = vadd.f32 %v2308, 1.0
    %v2313 = vadd.f32 %v2309, 1.0
    %v2314 = vadd.f32 %v2310, 1.0
    %v2315 = vmul.f32 %v2311, 0.5
    %v2316 = vmul.f32 %v2312, 0.5
    %v2317 = vmul.f32 %v2313, 0.5
    %v2318 = vmul.f32 %v2314, 0.5
    %v2319 = vmul.f32 %v2283, %v2315
    %v2320 = vmul.f32 %v2284, %v2316
    %v2321 = vmul.f32 %v2285, %v2317
    %v2322 = vmul.f32 %v2286, %v2318
    %v2323 = vadd.f32 %v2319, %v2320
    %v2324 = vrot.slane %v2323, 4
    %v2325 = vadd.f32 %v2323, %v2324
    %v2326 = vrot.slane %v2325, 2
    %v2327 = vadd.f32 %v2325, %v2326
    %v2328 = vrot.slane %v2327, 1
    %v2329 = vadd.f32 %v2327, %v2328
    %v2330 = vadd.f32 %v2321, %v2322
    %v2331 = vrot.slane %v2330, 4
    %v2332 = vadd.f32 %v2330, %v2331
    %v2333 = vrot.slane %v2332, 2
    %v2334 = vadd.f32 %v2332, %v2333
    %v2335 = vrot.slane %v2334, 1
    %v2336 = vadd.f32 %v2334, %v2335
    %v2337 = vrcp.pop 16.0
    %v2338 = vmul.f32 %v2329, %v2337
    %v2339 = vmul.f32 %v2336, %v2337
    %vm2342 = vcmask 1041409
    %v2343 = vsel %vm2342, %v2339, %v2338
    %2345 = vst [vmem:[#allocation8] sm:$0x3] %v2343
    // Predicated region
    $region34: #{tpu_custom_call.1} parent=1 // pred_check
      _
    $region35: #{tpu_custom_call.1} parent=1 // pred_check_branch
      %2347 = sbr.rel (0) target = $region37
    $region36: #{tpu_custom_call.1} parent=1 // pred_region
      %s2349 = ssub.s32 32, 32
      %2350 = vsyncadd [#allocation4], %s2349
      %s2352 = sshll.u32 [#allocation8], 4
      %s2353 = int_to_ptr.vmem [resolvable:$true] %s2352
      %2355 = dma.vmem_to_hbm [thread:$0]  %s2353, 32, %s5, [#allocation4]
    $region37: #{tpu_custom_call.1} parent=1 // pred_fallthru
      _
    // Predicated region
    $region38: #{tpu_custom_call.1} parent=1 // pred_check
      _
    $region39: #{tpu_custom_call.1} parent=1 // pred_check_branch
      %2357 = sbr.rel (0) target = $region41
    $region40: #{tpu_custom_call.1} parent=1 // pred_region
      %2358 = dma.done [#allocation4], 32
    $region41: #{tpu_custom_call.1} parent=1 // pred_fallthru
      _
    %2359 = vsyncpa [#allocation3], 1
    %2360 = vsyncpa [#allocation6], 1
    %2361 = vsyncpa [#allocation4], 1

</llo_original>
